<compile_context>
chip_gen: v7x
topology: tpu7x:2x2x1
jax: 0.10.0
libtpu: 0.0.40
codegen_flags: <defaults>
</compile_context>

<pallas_src>
import jax
import jax.numpy as jnp
from jax.experimental import pallas as pl
from jax.experimental.pallas import tpu as pltpu

_EPS = 1e-5


# ----------------------------------------------------------------------------
# Fused kernel: entire InceptionResNetA forward on a flattened (M=N*L, C) block.
# ----------------------------------------------------------------------------
def inception_resnet_a_kernel(
        x_ref, nf_ref, nl_ref,
        w_stem, g_stem, be_stem,
        w_b3b, g_b3b, be_b3b,
        w_sb, g_sb, be_sb,
        w_sc, g_sc, be_sc,
        w_red, b_red, b_sh,
        g_out, be_out,
        o_ref):
    f32 = jnp.float32
    bf16 = jnp.bfloat16

    not_first = nf_ref[...]          # (M, 1): 0.0 where row is l==0 of a sample
    not_last = nl_ref[...]           # (M, 1): 0.0 where row is l==L-1 of a sample

    def bn_relu(y, g_ref, be_ref):
        # Training-mode BatchNorm1d: two-pass (numerically safe) biased variance.
        mean = jnp.mean(y, axis=0, keepdims=True)
        d = y - mean
        var = jnp.mean(d * d, axis=0, keepdims=True)
        return jnp.maximum(d * jax.lax.rsqrt(var + _EPS) * g_ref[...] + be_ref[...], 0.0)

    def conv3(h, w_ref):
        # y[l] = h[l-1]@w0 + h[l]@w1 + h[l+1]@w2, zero-padded per sample.
        # Shifts on the XLU (roll) + VPU masks; im2col lane concat -> one matmul.
        hp = pltpu.roll(h, 1, axis=0) * not_first                 # h[l-1]
        hn = pltpu.roll(h, h.shape[0] - 1, axis=0) * not_last     # h[l+1]
        hcat = jnp.concatenate([hp, h, hn], axis=-1).astype(bf16)  # (M, 3*Cin)
        return jnp.dot(hcat, w_ref[...], preferred_element_type=f32)

    # --- fused stem: one K=Cin matmul for the three branch stems + shortcut ---
    # w_stem lane layout: [b1(32) | b3a(32) | sa(32) | pad(32) | shortcut(CoutP)]
    stem = jnp.dot(x_ref[...], w_stem[...], preferred_element_type=f32)
    act = bn_relu(stem[:, 0:96], g_stem, be_stem)     # BN+ReLU on the branch slab
    shortcut = stem[:, 128:] + b_sh[...]              # conv bias, no BN here

    b1 = act[:, 0:32]                                               # branch1x1
    b3 = bn_relu(conv3(act[:, 32:64], w_b3b), g_b3b, be_b3b)        # branch3x3
    st = bn_relu(conv3(act[:, 64:96], w_sb), g_sb, be_sb)           # branch3x3stack
    st = bn_relu(conv3(st, w_sc), g_sc, be_sc)

    # --- reduction1x1 over the concat [b1 | b3 | st] (128 lanes, one matmul) ---
    cat = jnp.concatenate([b1, b3, st], axis=-1).astype(bf16)       # (M, 128)
    residual = jnp.dot(cat, w_red[...], preferred_element_type=f32) + b_red[...]

    o_ref[...] = bn_relu(shortcut + residual, g_out, be_out)


# ----------------------------------------------------------------------------
# Wrapper: single pallas_call, everything whole-array resident in VMEM.
# ----------------------------------------------------------------------------
def _pad_cols(a, width):
    pad = width - a.shape[-1]
    if pad == 0:
        return a
    return jnp.pad(a, [(0, 0)] * (a.ndim - 1) + [(0, pad)])


def inception_resnet_a(x_ncl, params):
    N, cin, L = x_ncl.shape
    cout = params['w_red'].shape[-1]
    cout_p = ((cout + 127) // 128) * 128          # lane-dense output store
    M = N * L
    bf16 = jnp.bfloat16

    x2d = jnp.transpose(x_ncl, (0, 2, 1)).reshape(M, cin).astype(bf16)

    # Per-sample boundary masks for the +/-1 conv taps (precomputed, VMEM input).
    row = jnp.arange(M, dtype=jnp.int32) % L
    not_first = (row != 0).astype(jnp.float32)[:, None]
    not_last = (row != L - 1).astype(jnp.float32)[:, None]

    # Fused stem weight: [b1 | b3a | sa | 32-lane pad | shortcut(cout_p)].
    w_stem = jnp.concatenate([
        params['w_b1'], params['w_b3a'], params['w_sa'],
        jnp.zeros((cin, 32), jnp.float32),
        _pad_cols(params['w_sh'], cout_p)], axis=1).astype(bf16)
    g_stem = jnp.concatenate([params['g_b1'], params['g_b3a'], params['g_sa']], axis=1)
    be_stem = jnp.concatenate([params['be_b1'], params['be_b3a'], params['be_sa']], axis=1)

    # im2col conv3 weights: (3, Cin, Cout) -> (3*Cin, Cout), bf16.
    w_b3b = params['w_b3b'].reshape(-1, params['w_b3b'].shape[-1]).astype(bf16)
    w_sb = params['w_sb'].reshape(-1, params['w_sb'].shape[-1]).astype(bf16)
    w_sc = params['w_sc'].reshape(-1, params['w_sc'].shape[-1]).astype(bf16)

    w_red = _pad_cols(params['w_red'], cout_p).astype(bf16)
    b_red = _pad_cols(params['b_red'], cout_p)
    b_sh = _pad_cols(params['b_sh'], cout_p)
    g_out = _pad_cols(params['g_out'], cout_p)
    be_out = _pad_cols(params['be_out'], cout_p)

    args = (x2d, not_first, not_last,
            w_stem, g_stem, be_stem,
            w_b3b, params['g_b3b'], params['be_b3b'],
            w_sb, params['g_sb'], params['be_sb'],
            w_sc, params['g_sc'], params['be_sc'],
            w_red, b_red, b_sh, g_out, be_out)

    vmem = pl.BlockSpec(memory_space=pltpu.MemorySpace.VMEM)
    y2d = pl.pallas_call(
        inception_resnet_a_kernel,
        out_shape=jax.ShapeDtypeStruct((M, cout_p), jnp.float32),
        in_specs=[vmem] * len(args),
        out_specs=vmem,
    )(*args)
    y2d = y2d[:, :cout]
    return jnp.transpose(y2d.reshape(N, L, cout), (0, 2, 1))     # back to NCL


# ----------------------------------------------------------------------------
# Deterministic parameter initialisation (torch module, our channels-last
# layout: 1x1 conv -> (Cin, Cout); k=3 conv -> (3, Cin, Cout); BN -> (1, C)).
# ----------------------------------------------------------------------------
def init_params(key, cin, cout):
    keys = iter(jax.random.split(key, 32))
    nk = lambda: next(keys)

    def w(shape, fan_in):
        return jax.random.normal(nk(), shape, jnp.float32) * (2.0 / fan_in) ** 0.5

    def bn(c):
        g = 1.0 + 0.1 * jax.random.normal(nk(), (1, c), jnp.float32)
        b = 0.1 * jax.random.normal(nk(), (1, c), jnp.float32)
        return g, b

    p = {}
    p['w_b1'] = w((cin, 32), cin)
    p['g_b1'], p['be_b1'] = bn(32)
    p['w_b3a'] = w((cin, 32), cin)
    p['g_b3a'], p['be_b3a'] = bn(32)
    p['w_b3b'] = w((3, 32, 32), 3 * 32)
    p['g_b3b'], p['be_b3b'] = bn(32)
    p['w_sa'] = w((cin, 32), cin)
    p['g_sa'], p['be_sa'] = bn(32)
    p['w_sb'] = w((3, 32, 48), 3 * 32)
    p['g_sb'], p['be_sb'] = bn(48)
    p['w_sc'] = w((3, 48, 64), 3 * 48)
    p['g_sc'], p['be_sc'] = bn(64)
    p['w_red'] = w((128, cout), 128)
    p['b_red'] = 0.01 * jax.random.normal(nk(), (1, cout), jnp.float32)
    p['w_sh'] = w((cin, cout), cin)
    p['b_sh'] = 0.01 * jax.random.normal(nk(), (1, cout), jnp.float32)
    p['g_out'], p['be_out'] = bn(cout)
    return p


# ----------------------------------------------------------------------------
# Pure-JAX reference (literal translation of the torch forward).  matmul_dtype
# lets us build a matched-precision (bf16 operand) reference that checks the
# kernel's structure tightly, plus a full-f32 reference for a semantic sanity
# bound (bf16 operand rounding bounds that error).
# ----------------------------------------------------------------------------
def inception_resnet_a_ref(x_ncl, p, matmul_dtype=jnp.float32):
    md = matmul_dtype
    x = jnp.transpose(x_ncl, (0, 2, 1))                          # (N, L, Cin)

    def bn_relu(y, g, be):
        mean = jnp.mean(y, axis=(0, 1), keepdims=True)
        var = jnp.mean(jnp.square(y - mean), axis=(0, 1), keepdims=True)
        return jnp.maximum((y - mean) * jax.lax.rsqrt(var + _EPS) * g + be, 0.0)

    def dot(h, w):
        return jnp.einsum('nlc,cd->nld', h.astype(md), w.astype(md),
                          preferred_element_type=jnp.float32)

    def conv3(h, w):
        L = h.shape[1]
        hp = jnp.pad(h, ((0, 0), (1, 1), (0, 0)))
        return (dot(hp[:, 0:L], w[0]) + dot(hp[:, 1:L + 1], w[1])
                + dot(hp[:, 2:L + 2], w[2]))

    b1 = bn_relu(dot(x, p['w_b1']), p['g_b1'], p['be_b1'])
    b3 = bn_relu(dot(x, p['w_b3a']), p['g_b3a'], p['be_b3a'])
    b3 = bn_relu(conv3(b3, p['w_b3b']), p['g_b3b'], p['be_b3b'])
    st = bn_relu(dot(x, p['w_sa']), p['g_sa'], p['be_sa'])
    st = bn_relu(conv3(st, p['w_sb']), p['g_sb'], p['be_sb'])
    st = bn_relu(conv3(st, p['w_sc']), p['g_sc'], p['be_sc'])

    cat = jnp.concatenate([b1, b3, st], axis=-1)                 # torch.cat(dim=1)
    residual = dot(cat, p['w_red']) + p['b_red']
    shortcut = dot(x, p['w_sh']) + p['b_sh']
    out = bn_relu(shortcut + residual, p['g_out'], p['be_out'])
    return jnp.transpose(out, (0, 2, 1))                         # (N, Cout, L)


# ----------------------------------------------------------------------------
if __name__ == "__main__":
    N, C_IN, L, C_OUT = 2, 8, 64, 64
    key = jax.random.PRNGKey(0)
    kx, kp = jax.random.split(key)
    x = jax.random.normal(kx, (N, C_IN, L), jnp.float32)         # PyTorch NCL input
    params = init_params(kp, C_IN, C_OUT)

    out = jax.jit(inception_resnet_a)(x, params)
    out = jax.block_until_ready(out)
    assert out.shape == (N, C_OUT, L), out.shape

    # Tight check against a matched-precision (bf16 matmul operand) reference:
    # validates the kernel structure (rolls, masks, im2col, fused stem, BN).
    ref_bf16 = inception_resnet_a_ref(x, params, matmul_dtype=jnp.bfloat16)
    err_logic = float(jnp.max(jnp.abs(out - ref_bf16)))
    assert err_logic < 2e-3, f"max abs error vs matched-precision ref: {err_logic}"

    # Loose sanity check against the full-f32 reference (bound set by bf16
    # operand rounding through 4 conv+BN layers; accumulation is f32).
    ref_f32 = inception_resnet_a_ref(x, params, matmul_dtype=jnp.float32)
    err_full = float(jnp.max(jnp.abs(out - ref_f32)))
    assert err_full < 1e-1, f"max abs error vs f32 reference: {err_full}"

    print("KERNEL_OK")
</pallas_src>

<mosaic_0001>
module attributes {stable_mosaic.version = 11 : i64} {
  func.func @inception_resnet_a_kernel(%arg0: memref<128x8xbf16, #tpu.memory_space<vmem>>, %arg1: memref<128x1xf32, #tpu.memory_space<vmem>>, %arg2: memref<128x1xf32, #tpu.memory_space<vmem>>, %arg3: memref<8x256xbf16, #tpu.memory_space<vmem>>, %arg4: memref<1x96xf32, #tpu.memory_space<vmem>>, %arg5: memref<1x96xf32, #tpu.memory_space<vmem>>, %arg6: memref<96x32xbf16, #tpu.memory_space<vmem>>, %arg7: memref<1x32xf32, #tpu.memory_space<vmem>>, %arg8: memref<1x32xf32, #tpu.memory_space<vmem>>, %arg9: memref<96x48xbf16, #tpu.memory_space<vmem>>, %arg10: memref<1x48xf32, #tpu.memory_space<vmem>>, %arg11: memref<1x48xf32, #tpu.memory_space<vmem>>, %arg12: memref<144x64xbf16, #tpu.memory_space<vmem>>, %arg13: memref<1x64xf32, #tpu.memory_space<vmem>>, %arg14: memref<1x64xf32, #tpu.memory_space<vmem>>, %arg15: memref<128x128xbf16, #tpu.memory_space<vmem>>, %arg16: memref<1x128xf32, #tpu.memory_space<vmem>>, %arg17: memref<1x128xf32, #tpu.memory_space<vmem>>, %arg18: memref<1x128xf32, #tpu.memory_space<vmem>>, %arg19: memref<1x128xf32, #tpu.memory_space<vmem>>, %arg20: memref<128x128xf32, #tpu.memory_space<vmem>>) attributes {dimension_semantics = [], scalar_prefetch = 0 : i64, scratch_operands = 0 : i64, tpu.core_type = #tpu.core_type<tc>} {
    %c0 = arith.constant 0 : index
    %c0_0 = arith.constant 0 : index
    %0 = vector.load %arg1[%c0, %c0_0] : memref<128x1xf32, #tpu.memory_space<vmem>>, vector<128x1xf32>
    %c0_1 = arith.constant 0 : index
    %c0_2 = arith.constant 0 : index
    %1 = vector.load %arg2[%c0_1, %c0_2] : memref<128x1xf32, #tpu.memory_space<vmem>>, vector<128x1xf32>
    %c0_3 = arith.constant 0 : index
    %c0_4 = arith.constant 0 : index
    %2 = vector.load %arg0[%c0_3, %c0_4] : memref<128x8xbf16, #tpu.memory_space<vmem>>, vector<128x8xbf16>
    %c0_5 = arith.constant 0 : index
    %c0_6 = arith.constant 0 : index
    %3 = vector.load %arg3[%c0_5, %c0_6] : memref<8x256xbf16, #tpu.memory_space<vmem>>, vector<8x256xbf16>
    %cst = arith.constant dense<0.000000e+00> : vector<128x256xf32>
    %4 = tpu.matmul %2, %3, %cst {dimension_numbers = #tpu.dot_dimension_numbers<[1], [0], [0], [1], [0, 0, 1, 1], [], []>} : vector<128x8xbf16>, vector<8x256xbf16>, vector<128x256xf32> -> vector<128x256xf32>
    %5 = vector.extract_strided_slice %4 {offsets = [0, 0], sizes = [128, 96], strides = [1, 1]} : vector<128x256xf32> to vector<128x96xf32>
    %cst_7 = arith.constant dense<0.000000e+00> : vector<96xf32>
    %6 = vector.multi_reduction <add>, %5, %cst_7 [0] : vector<128x96xf32> to vector<96xf32>
    %7 = vector.shape_cast %6 : vector<96xf32> to vector<1x96xf32>
    %cst_8 = arith.constant 1.280000e+02 : f32
    %8 = vector.broadcast %cst_8 : f32 to vector<1x96xf32>
    %9 = arith.divf %7, %8 : vector<1x96xf32>
    %10 = vector.broadcast %9 : vector<1x96xf32> to vector<128x96xf32>
    %11 = arith.subf %5, %10 : vector<128x96xf32>
    %12 = arith.mulf %11, %11 : vector<128x96xf32>
    %cst_9 = arith.constant dense<0.000000e+00> : vector<96xf32>
    %13 = vector.multi_reduction <add>, %12, %cst_9 [0] : vector<128x96xf32> to vector<96xf32>
    %14 = vector.shape_cast %13 : vector<96xf32> to vector<1x96xf32>
    %cst_10 = arith.constant 1.280000e+02 : f32
    %15 = vector.broadcast %cst_10 : f32 to vector<1x96xf32>
    %16 = arith.divf %14, %15 : vector<1x96xf32>
    %cst_11 = arith.constant 9.99999974E-6 : f32
    %17 = vector.broadcast %cst_11 : f32 to vector<1x96xf32>
    %18 = arith.addf %16, %17 : vector<1x96xf32>
    %19 = math.rsqrt %18 : vector<1x96xf32>
    %20 = vector.broadcast %19 : vector<1x96xf32> to vector<128x96xf32>
    %21 = arith.mulf %11, %20 : vector<128x96xf32>
    %c0_12 = arith.constant 0 : index
    %c0_13 = arith.constant 0 : index
    %22 = vector.load %arg4[%c0_12, %c0_13] : memref<1x96xf32, #tpu.memory_space<vmem>>, vector<1x96xf32>
    %23 = vector.broadcast %22 : vector<1x96xf32> to vector<128x96xf32>
    %24 = arith.mulf %21, %23 : vector<128x96xf32>
    %c0_14 = arith.constant 0 : index
    %c0_15 = arith.constant 0 : index
    %25 = vector.load %arg5[%c0_14, %c0_15] : memref<1x96xf32, #tpu.memory_space<vmem>>, vector<1x96xf32>
    %26 = vector.broadcast %25 : vector<1x96xf32> to vector<128x96xf32>
    %27 = arith.addf %24, %26 : vector<128x96xf32>
    %cst_16 = arith.constant 0.000000e+00 : f32
    %28 = vector.broadcast %cst_16 : f32 to vector<128x96xf32>
    %29 = arith.maximumf %27, %28 : vector<128x96xf32>
    %30 = vector.extract_strided_slice %4 {offsets = [0, 128], sizes = [128, 128], strides = [1, 1]} : vector<128x256xf32> to vector<128x128xf32>
    %c0_17 = arith.constant 0 : index
    %c0_18 = arith.constant 0 : index
    %31 = vector.load %arg17[%c0_17, %c0_18] : memref<1x128xf32, #tpu.memory_space<vmem>>, vector<1x128xf32>
    %32 = vector.broadcast %31 : vector<1x128xf32> to vector<128x128xf32>
    %33 = arith.addf %30, %32 : vector<128x128xf32>
    %34 = vector.extract_strided_slice %29 {offsets = [0, 0], sizes = [128, 32], strides = [1, 1]} : vector<128x96xf32> to vector<128x32xf32>
    %35 = vector.extract_strided_slice %29 {offsets = [0, 32], sizes = [128, 32], strides = [1, 1]} : vector<128x96xf32> to vector<128x32xf32>
    %c1_i32 = arith.constant 1 : i32
    %36 = tpu.dynamic_rotate %35 by %c1_i32 dim 0 : vector<128x32xf32>, i32 -> vector<128x32xf32>
    %37 = vector.broadcast %0 : vector<128x1xf32> to vector<128x32xf32>
    %38 = arith.mulf %36, %37 : vector<128x32xf32>
    %c127_i32 = arith.constant 127 : i32
    %39 = tpu.dynamic_rotate %35 by %c127_i32 dim 0 : vector<128x32xf32>, i32 -> vector<128x32xf32>
    %40 = vector.broadcast %1 : vector<128x1xf32> to vector<128x32xf32>
    %41 = arith.mulf %39, %40 : vector<128x32xf32>
    %42 = tpu.concatenate %38, %35, %41 in 1 : vector<128x32xf32>, vector<128x32xf32>, vector<128x32xf32> -> vector<128x96xf32>
    %43 = arith.truncf %42 : vector<128x96xf32> to vector<128x96xbf16>
    %c0_19 = arith.constant 0 : index
    %c0_20 = arith.constant 0 : index
    %44 = vector.load %arg6[%c0_19, %c0_20] : memref<96x32xbf16, #tpu.memory_space<vmem>>, vector<96x32xbf16>
    %cst_21 = arith.constant dense<0.000000e+00> : vector<128x32xf32>
    %45 = tpu.matmul %43, %44, %cst_21 {dimension_numbers = #tpu.dot_dimension_numbers<[1], [0], [0], [1], [0, 0, 1, 1], [], []>} : vector<128x96xbf16>, vector<96x32xbf16>, vector<128x32xf32> -> vector<128x32xf32>
    %cst_22 = arith.constant dense<0.000000e+00> : vector<32xf32>
    %46 = vector.multi_reduction <add>, %45, %cst_22 [0] : vector<128x32xf32> to vector<32xf32>
    %47 = vector.shape_cast %46 : vector<32xf32> to vector<1x32xf32>
    %cst_23 = arith.constant 1.280000e+02 : f32
    %48 = vector.broadcast %cst_23 : f32 to vector<1x32xf32>
    %49 = arith.divf %47, %48 : vector<1x32xf32>
    %50 = vector.broadcast %49 : vector<1x32xf32> to vector<128x32xf32>
    %51 = arith.subf %45, %50 : vector<128x32xf32>
    %52 = arith.mulf %51, %51 : vector<128x32xf32>
    %cst_24 = arith.constant dense<0.000000e+00> : vector<32xf32>
    %53 = vector.multi_reduction <add>, %52, %cst_24 [0] : vector<128x32xf32> to vector<32xf32>
    %54 = vector.shape_cast %53 : vector<32xf32> to vector<1x32xf32>
    %cst_25 = arith.constant 1.280000e+02 : f32
    %55 = vector.broadcast %cst_25 : f32 to vector<1x32xf32>
    %56 = arith.divf %54, %55 : vector<1x32xf32>
    %cst_26 = arith.constant 9.99999974E-6 : f32
    %57 = vector.broadcast %cst_26 : f32 to vector<1x32xf32>
    %58 = arith.addf %56, %57 : vector<1x32xf32>
    %59 = math.rsqrt %58 : vector<1x32xf32>
    %60 = vector.broadcast %59 : vector<1x32xf32> to vector<128x32xf32>
    %61 = arith.mulf %51, %60 : vector<128x32xf32>
    %c0_27 = arith.constant 0 : index
    %c0_28 = arith.constant 0 : index
    %62 = vector.load %arg7[%c0_27, %c0_28] : memref<1x32xf32, #tpu.memory_space<vmem>>, vector<1x32xf32>
    %63 = vector.broadcast %62 : vector<1x32xf32> to vector<128x32xf32>
    %64 = arith.mulf %61, %63 : vector<128x32xf32>
    %c0_29 = arith.constant 0 : index
    %c0_30 = arith.constant 0 : index
    %65 = vector.load %arg8[%c0_29, %c0_30] : memref<1x32xf32, #tpu.memory_space<vmem>>, vector<1x32xf32>
    %66 = vector.broadcast %65 : vector<1x32xf32> to vector<128x32xf32>
    %67 = arith.addf %64, %66 : vector<128x32xf32>
    %cst_31 = arith.constant 0.000000e+00 : f32
    %68 = vector.broadcast %cst_31 : f32 to vector<128x32xf32>
    %69 = arith.maximumf %67, %68 : vector<128x32xf32>
    %70 = vector.extract_strided_slice %29 {offsets = [0, 64], sizes = [128, 32], strides = [1, 1]} : vector<128x96xf32> to vector<128x32xf32>
    %c1_i32_32 = arith.constant 1 : i32
    %71 = tpu.dynamic_rotate %70 by %c1_i32_32 dim 0 : vector<128x32xf32>, i32 -> vector<128x32xf32>
    %72 = vector.broadcast %0 : vector<128x1xf32> to vector<128x32xf32>
    %73 = arith.mulf %71, %72 : vector<128x32xf32>
    %c127_i32_33 = arith.constant 127 : i32
    %74 = tpu.dynamic_rotate %70 by %c127_i32_33 dim 0 : vector<128x32xf32>, i32 -> vector<128x32xf32>
    %75 = vector.broadcast %1 : vector<128x1xf32> to vector<128x32xf32>
    %76 = arith.mulf %74, %75 : vector<128x32xf32>
    %77 = tpu.concatenate %73, %70, %76 in 1 : vector<128x32xf32>, vector<128x32xf32>, vector<128x32xf32> -> vector<128x96xf32>
    %78 = arith.truncf %77 : vector<128x96xf32> to vector<128x96xbf16>
    %c0_34 = arith.constant 0 : index
    %c0_35 = arith.constant 0 : index
    %79 = vector.load %arg9[%c0_34, %c0_35] : memref<96x48xbf16, #tpu.memory_space<vmem>>, vector<96x48xbf16>
    %cst_36 = arith.constant dense<0.000000e+00> : vector<128x48xf32>
    %80 = tpu.matmul %78, %79, %cst_36 {dimension_numbers = #tpu.dot_dimension_numbers<[1], [0], [0], [1], [0, 0, 1, 1], [], []>} : vector<128x96xbf16>, vector<96x48xbf16>, vector<128x48xf32> -> vector<128x48xf32>
    %cst_37 = arith.constant dense<0.000000e+00> : vector<48xf32>
    %81 = vector.multi_reduction <add>, %80, %cst_37 [0] : vector<128x48xf32> to vector<48xf32>
    %82 = vector.shape_cast %81 : vector<48xf32> to vector<1x48xf32>
    %cst_38 = arith.constant 1.280000e+02 : f32
    %83 = vector.broadcast %cst_38 : f32 to vector<1x48xf32>
    %84 = arith.divf %82, %83 : vector<1x48xf32>
    %85 = vector.broadcast %84 : vector<1x48xf32> to vector<128x48xf32>
    %86 = arith.subf %80, %85 : vector<128x48xf32>
    %87 = arith.mulf %86, %86 : vector<128x48xf32>
    %cst_39 = arith.constant dense<0.000000e+00> : vector<48xf32>
    %88 = vector.multi_reduction <add>, %87, %cst_39 [0] : vector<128x48xf32> to vector<48xf32>
    %89 = vector.shape_cast %88 : vector<48xf32> to vector<1x48xf32>
    %cst_40 = arith.constant 1.280000e+02 : f32
    %90 = vector.broadcast %cst_40 : f32 to vector<1x48xf32>
    %91 = arith.divf %89, %90 : vector<1x48xf32>
    %cst_41 = arith.constant 9.99999974E-6 : f32
    %92 = vector.broadcast %cst_41 : f32 to vector<1x48xf32>
    %93 = arith.addf %91, %92 : vector<1x48xf32>
    %94 = math.rsqrt %93 : vector<1x48xf32>
    %95 = vector.broadcast %94 : vector<1x48xf32> to vector<128x48xf32>
    %96 = arith.mulf %86, %95 : vector<128x48xf32>
    %c0_42 = arith.constant 0 : index
    %c0_43 = arith.constant 0 : index
    %97 = vector.load %arg10[%c0_42, %c0_43] : memref<1x48xf32, #tpu.memory_space<vmem>>, vector<1x48xf32>
    %98 = vector.broadcast %97 : vector<1x48xf32> to vector<128x48xf32>
    %99 = arith.mulf %96, %98 : vector<128x48xf32>
    %c0_44 = arith.constant 0 : index
    %c0_45 = arith.constant 0 : index
    %100 = vector.load %arg11[%c0_44, %c0_45] : memref<1x48xf32, #tpu.memory_space<vmem>>, vector<1x48xf32>
    %101 = vector.broadcast %100 : vector<1x48xf32> to vector<128x48xf32>
    %102 = arith.addf %99, %101 : vector<128x48xf32>
    %cst_46 = arith.constant 0.000000e+00 : f32
    %103 = vector.broadcast %cst_46 : f32 to vector<128x48xf32>
    %104 = arith.maximumf %102, %103 : vector<128x48xf32>
    %c1_i32_47 = arith.constant 1 : i32
    %105 = tpu.dynamic_rotate %104 by %c1_i32_47 dim 0 : vector<128x48xf32>, i32 -> vector<128x48xf32>
    %106 = vector.broadcast %0 : vector<128x1xf32> to vector<128x48xf32>
    %107 = arith.mulf %105, %106 : vector<128x48xf32>
    %c127_i32_48 = arith.constant 127 : i32
    %108 = tpu.dynamic_rotate %104 by %c127_i32_48 dim 0 : vector<128x48xf32>, i32 -> vector<128x48xf32>
    %109 = vector.broadcast %1 : vector<128x1xf32> to vector<128x48xf32>
    %110 = arith.mulf %108, %109 : vector<128x48xf32>
    %111 = tpu.concatenate %107, %104, %110 in 1 : vector<128x48xf32>, vector<128x48xf32>, vector<128x48xf32> -> vector<128x144xf32>
    %112 = arith.truncf %111 : vector<128x144xf32> to vector<128x144xbf16>
    %c0_49 = arith.constant 0 : index
    %c0_50 = arith.constant 0 : index
    %113 = vector.load %arg12[%c0_49, %c0_50] : memref<144x64xbf16, #tpu.memory_space<vmem>>, vector<144x64xbf16>
    %cst_51 = arith.constant dense<0.000000e+00> : vector<128x64xf32>
    %114 = tpu.matmul %112, %113, %cst_51 {dimension_numbers = #tpu.dot_dimension_numbers<[1], [0], [0], [1], [0, 0, 1, 1], [], []>} : vector<128x144xbf16>, vector<144x64xbf16>, vector<128x64xf32> -> vector<128x64xf32>
    %cst_52 = arith.constant dense<0.000000e+00> : vector<64xf32>
    %115 = vector.multi_reduction <add>, %114, %cst_52 [0] : vector<128x64xf32> to vector<64xf32>
    %116 = vector.shape_cast %115 : vector<64xf32> to vector<1x64xf32>
    %cst_53 = arith.constant 1.280000e+02 : f32
    %117 = vector.broadcast %cst_53 : f32 to vector<1x64xf32>
    %118 = arith.divf %116, %117 : vector<1x64xf32>
    %119 = vector.broadcast %118 : vector<1x64xf32> to vector<128x64xf32>
    %120 = arith.subf %114, %119 : vector<128x64xf32>
    %121 = arith.mulf %120, %120 : vector<128x64xf32>
    %cst_54 = arith.constant dense<0.000000e+00> : vector<64xf32>
    %122 = vector.multi_reduction <add>, %121, %cst_54 [0] : vector<128x64xf32> to vector<64xf32>
    %123 = vector.shape_cast %122 : vector<64xf32> to vector<1x64xf32>
    %cst_55 = arith.constant 1.280000e+02 : f32
    %124 = vector.broadcast %cst_55 : f32 to vector<1x64xf32>
    %125 = arith.divf %123, %124 : vector<1x64xf32>
    %cst_56 = arith.constant 9.99999974E-6 : f32
    %126 = vector.broadcast %cst_56 : f32 to vector<1x64xf32>
    %127 = arith.addf %125, %126 : vector<1x64xf32>
    %128 = math.rsqrt %127 : vector<1x64xf32>
    %129 = vector.broadcast %128 : vector<1x64xf32> to vector<128x64xf32>
    %130 = arith.mulf %120, %129 : vector<128x64xf32>
    %c0_57 = arith.constant 0 : index
    %c0_58 = arith.constant 0 : index
    %131 = vector.load %arg13[%c0_57, %c0_58] : memref<1x64xf32, #tpu.memory_space<vmem>>, vector<1x64xf32>
    %132 = vector.broadcast %131 : vector<1x64xf32> to vector<128x64xf32>
    %133 = arith.mulf %130, %132 : vector<128x64xf32>
    %c0_59 = arith.constant 0 : index
    %c0_60 = arith.constant 0 : index
    %134 = vector.load %arg14[%c0_59, %c0_60] : memref<1x64xf32, #tpu.memory_space<vmem>>, vector<1x64xf32>
    %135 = vector.broadcast %134 : vector<1x64xf32> to vector<128x64xf32>
    %136 = arith.addf %133, %135 : vector<128x64xf32>
    %cst_61 = arith.constant 0.000000e+00 : f32
    %137 = vector.broadcast %cst_61 : f32 to vector<128x64xf32>
    %138 = arith.maximumf %136, %137 : vector<128x64xf32>
    %139 = tpu.concatenate %34, %69, %138 in 1 : vector<128x32xf32>, vector<128x32xf32>, vector<128x64xf32> -> vector<128x128xf32>
    %140 = arith.truncf %139 : vector<128x128xf32> to vector<128x128xbf16>
    %c0_62 = arith.constant 0 : index
    %c0_63 = arith.constant 0 : index
    %141 = vector.load %arg15[%c0_62, %c0_63] : memref<128x128xbf16, #tpu.memory_space<vmem>>, vector<128x128xbf16>
    %cst_64 = arith.constant dense<0.000000e+00> : vector<128x128xf32>
    %142 = tpu.matmul %140, %141, %cst_64 {dimension_numbers = #tpu.dot_dimension_numbers<[1], [0], [0], [1], [0, 0, 1, 1], [], []>} : vector<128x128xbf16>, vector<128x128xbf16>, vector<128x128xf32> -> vector<128x128xf32>
    %c0_65 = arith.constant 0 : index
    %c0_66 = arith.constant 0 : index
    %143 = vector.load %arg16[%c0_65, %c0_66] : memref<1x128xf32, #tpu.memory_space<vmem>>, vector<1x128xf32>
    %144 = vector.broadcast %143 : vector<1x128xf32> to vector<128x128xf32>
    %145 = arith.addf %142, %144 : vector<128x128xf32>
    %146 = arith.addf %33, %145 : vector<128x128xf32>
    %cst_67 = arith.constant dense<0.000000e+00> : vector<128xf32>
    %147 = vector.multi_reduction <add>, %146, %cst_67 [0] : vector<128x128xf32> to vector<128xf32>
    %148 = vector.shape_cast %147 : vector<128xf32> to vector<1x128xf32>
    %cst_68 = arith.constant 1.280000e+02 : f32
    %149 = vector.broadcast %cst_68 : f32 to vector<1x128xf32>
    %150 = arith.divf %148, %149 : vector<1x128xf32>
    %151 = vector.broadcast %150 : vector<1x128xf32> to vector<128x128xf32>
    %152 = arith.subf %146, %151 : vector<128x128xf32>
    %153 = arith.mulf %152, %152 : vector<128x128xf32>
    %cst_69 = arith.constant dense<0.000000e+00> : vector<128xf32>
    %154 = vector.multi_reduction <add>, %153, %cst_69 [0] : vector<128x128xf32> to vector<128xf32>
    %155 = vector.shape_cast %154 : vector<128xf32> to vector<1x128xf32>
    %cst_70 = arith.constant 1.280000e+02 : f32
    %156 = vector.broadcast %cst_70 : f32 to vector<1x128xf32>
    %157 = arith.divf %155, %156 : vector<1x128xf32>
    %cst_71 = arith.constant 9.99999974E-6 : f32
    %158 = vector.broadcast %cst_71 : f32 to vector<1x128xf32>
    %159 = arith.addf %157, %158 : vector<1x128xf32>
    %160 = math.rsqrt %159 : vector<1x128xf32>
    %161 = vector.broadcast %160 : vector<1x128xf32> to vector<128x128xf32>
    %162 = arith.mulf %152, %161 : vector<128x128xf32>
    %c0_72 = arith.constant 0 : index
    %c0_73 = arith.constant 0 : index
    %163 = vector.load %arg18[%c0_72, %c0_73] : memref<1x128xf32, #tpu.memory_space<vmem>>, vector<1x128xf32>
    %164 = vector.broadcast %163 : vector<1x128xf32> to vector<128x128xf32>
    %165 = arith.mulf %162, %164 : vector<128x128xf32>
    %c0_74 = arith.constant 0 : index
    %c0_75 = arith.constant 0 : index
    %166 = vector.load %arg19[%c0_74, %c0_75] : memref<1x128xf32, #tpu.memory_space<vmem>>, vector<1x128xf32>
    %167 = vector.broadcast %166 : vector<1x128xf32> to vector<128x128xf32>
    %168 = arith.addf %165, %167 : vector<128x128xf32>
    %cst_76 = arith.constant 0.000000e+00 : f32
    %169 = vector.broadcast %cst_76 : f32 to vector<128x128xf32>
    %170 = arith.maximumf %168, %169 : vector<128x128xf32>
    %c0_77 = arith.constant 0 : index
    %c0_78 = arith.constant 0 : index
    %171 = vector.load %arg20[%c0_77, %c0_78] : memref<128x128xf32, #tpu.memory_space<vmem>>, vector<128x128xf32>
    tpu.vector_store %arg20[%c0_77, %c0_78], %170 {strides = array<i32>} : memref<128x128xf32, #tpu.memory_space<vmem>>, vector<128x128xf32>,
    return
  }
}

</mosaic_0001>

<llo_original>
// kernel: inception_resnet_a.1
$region0: #{inception_resnet_a.1}
  #allocation0 [shape = 'u32[]', space=smem, size = 0x4, offset = 0x4, fixed_abs, tag = 'smem constant byte address 0x4 - core index']
  #allocation1 [shape = 'u32[144,128]{1,0:T(1,128)}', space=vmem, size = 0x12000, scoped, tag = 'internal scratch']
  %s0 = inlined_call_operand.vmem [shape: bf16[128,8], index: 0, kind: input, shape index: {}]
  %s1 = inlined_call_operand.vmem [shape: f32[128,1], index: 1, kind: input, shape index: {}]
  %s2 = inlined_call_operand.vmem [shape: f32[128,1], index: 2, kind: input, shape index: {}]
  %s3 = inlined_call_operand.vmem [shape: bf16[8,256], index: 3, kind: input, shape index: {}]
  %s4 = inlined_call_operand.vmem [shape: f32[1,96], index: 4, kind: input, shape index: {}]
  %s5 = inlined_call_operand.vmem [shape: f32[1,96], index: 5, kind: input, shape index: {}]
  %s6 = inlined_call_operand.vmem [shape: bf16[96,32], index: 6, kind: input, shape index: {}]
  %s7 = inlined_call_operand.vmem [shape: f32[1,32], index: 7, kind: input, shape index: {}]
  %s8 = inlined_call_operand.vmem [shape: f32[1,32], index: 8, kind: input, shape index: {}]
  %s9 = inlined_call_operand.vmem [shape: bf16[96,48], index: 9, kind: input, shape index: {}]
  %s10 = inlined_call_operand.vmem [shape: f32[1,48], index: 10, kind: input, shape index: {}]
  %s11 = inlined_call_operand.vmem [shape: f32[1,48], index: 11, kind: input, shape index: {}]
  %s12 = inlined_call_operand.vmem [shape: bf16[144,64], index: 12, kind: input, shape index: {}]
  %s13 = inlined_call_operand.vmem [shape: f32[1,64], index: 13, kind: input, shape index: {}]
  %s14 = inlined_call_operand.vmem [shape: f32[1,64], index: 14, kind: input, shape index: {}]
  %s15 = inlined_call_operand.vmem [shape: bf16[128,128], index: 15, kind: input, shape index: {}]
  %s16 = inlined_call_operand.vmem [shape: f32[1,128], index: 16, kind: input, shape index: {}]
  %s17 = inlined_call_operand.vmem [shape: f32[1,128], index: 17, kind: input, shape index: {}]
  %s18 = inlined_call_operand.vmem [shape: f32[1,128], index: 18, kind: input, shape index: {}]
  %s19 = inlined_call_operand.vmem [shape: f32[1,128], index: 19, kind: input, shape index: {}]
  %s20 = inlined_call_operand.vmem [shape: f32[128,128], index: 20, kind: output, shape index: {}]
  %s21 = sld [smem:[#allocation0]]
  $region90: #{inception_resnet_a.1} parent=0
    _
  %s23 = ssub.s32 1, %s21
  %s24 = scalar_select 0, %s23, %s21
  // Predicated region
  $region2: #{inception_resnet_a.1} parent=0 // pred_check
    _
  $region3: #{inception_resnet_a.1} parent=0 // pred_check_branch
    %26 = sbr.rel (0) target = $region5
  $region4: #{inception_resnet_a.1} parent=0 // pred_region
    _
  $region5: #{inception_resnet_a.1} parent=0 // pred_fallthru
    _
  // Predicated region
  $region6: #{inception_resnet_a.1} parent=0 // pred_check
    _
  $region7: #{inception_resnet_a.1} parent=0 // pred_check_branch
    %28 = sbr.rel (0) target = $region9
  $region8: #{inception_resnet_a.1} parent=0 // pred_region
    _
  $region9: #{inception_resnet_a.1} parent=0 // pred_fallthru
    _
  // Predicated region
  $region10: #{inception_resnet_a.1} parent=0 // pred_check
    _
  $region11: #{inception_resnet_a.1} parent=0 // pred_check_branch
    %30 = sbr.rel (0) target = $region13
  $region12: #{inception_resnet_a.1} parent=0 // pred_region
    _
  $region13: #{inception_resnet_a.1} parent=0 // pred_fallthru
    _
  // Predicated region
  $region14: #{inception_resnet_a.1} parent=0 // pred_check
    _
  $region15: #{inception_resnet_a.1} parent=0 // pred_check_branch
    %32 = sbr.rel (0) target = $region17
  $region16: #{inception_resnet_a.1} parent=0 // pred_region
    _
  $region17: #{inception_resnet_a.1} parent=0 // pred_fallthru
    _
  // Predicated region
  $region18: #{inception_resnet_a.1} parent=0 // pred_check
    _
  $region19: #{inception_resnet_a.1} parent=0 // pred_check_branch
    %34 = sbr.rel (0) target = $region21
  $region20: #{inception_resnet_a.1} parent=0 // pred_region
    _
  $region21: #{inception_resnet_a.1} parent=0 // pred_fallthru
    _
  // Predicated region
  $region22: #{inception_resnet_a.1} parent=0 // pred_check
    _
  $region23: #{inception_resnet_a.1} parent=0 // pred_check_branch
    %36 = sbr.rel (0) target = $region25
  $region24: #{inception_resnet_a.1} parent=0 // pred_region
    _
  $region25: #{inception_resnet_a.1} parent=0 // pred_fallthru
    _
  // Predicated region
  $region26: #{inception_resnet_a.1} parent=0 // pred_check
    _
  $region27: #{inception_resnet_a.1} parent=0 // pred_check_branch
    %38 = sbr.rel (0) target = $region29
  $region28: #{inception_resnet_a.1} parent=0 // pred_region
    _
  $region29: #{inception_resnet_a.1} parent=0 // pred_fallthru
    _
  // Predicated region
  $region30: #{inception_resnet_a.1} parent=0 // pred_check
    _
  $region31: #{inception_resnet_a.1} parent=0 // pred_check_branch
    %40 = sbr.rel (0) target = $region33
  $region32: #{inception_resnet_a.1} parent=0 // pred_region
    _
  $region33: #{inception_resnet_a.1} parent=0 // pred_fallthru
    _
  // Predicated region
  $region34: #{inception_resnet_a.1} parent=0 // pred_check
    _
  $region35: #{inception_resnet_a.1} parent=0 // pred_check_branch
    %42 = sbr.rel (0) target = $region37
  $region36: #{inception_resnet_a.1} parent=0 // pred_region
    _
  $region37: #{inception_resnet_a.1} parent=0 // pred_fallthru
    _
  // Predicated region
  $region38: #{inception_resnet_a.1} parent=0 // pred_check
    _
  $region39: #{inception_resnet_a.1} parent=0 // pred_check_branch
    %44 = sbr.rel (0) target = $region41
  $region40: #{inception_resnet_a.1} parent=0 // pred_region
    _
  $region41: #{inception_resnet_a.1} parent=0 // pred_fallthru
    _
  // Predicated region
  $region42: #{inception_resnet_a.1} parent=0 // pred_check
    _
  $region43: #{inception_resnet_a.1} parent=0 // pred_check_branch
    %46 = sbr.rel (0) target = $region45
  $region44: #{inception_resnet_a.1} parent=0 // pred_region
    _
  $region45: #{inception_resnet_a.1} parent=0 // pred_fallthru
    _
  // Predicated region
  $region46: #{inception_resnet_a.1} parent=0 // pred_check
    _
  $region47: #{inception_resnet_a.1} parent=0 // pred_check_branch
    %48 = sbr.rel (0) target = $region49
  $region48: #{inception_resnet_a.1} parent=0 // pred_region
    _
  $region49: #{inception_resnet_a.1} parent=0 // pred_fallthru
    _
  // Predicated region
  $region50: #{inception_resnet_a.1} parent=0 // pred_check
    _
  $region51: #{inception_resnet_a.1} parent=0 // pred_check_branch
    %50 = sbr.rel (0) target = $region53
  $region52: #{inception_resnet_a.1} parent=0 // pred_region
    _
  $region53: #{inception_resnet_a.1} parent=0 // pred_fallthru
    _
  // Predicated region
  $region54: #{inception_resnet_a.1} parent=0 // pred_check
    _
  $region55: #{inception_resnet_a.1} parent=0 // pred_check_branch
    %52 = sbr.rel (0) target = $region57
  $region56: #{inception_resnet_a.1} parent=0 // pred_region
    _
  $region57: #{inception_resnet_a.1} parent=0 // pred_fallthru
    _
  // Predicated region
  $region58: #{inception_resnet_a.1} parent=0 // pred_check
    _
  $region59: #{inception_resnet_a.1} parent=0 // pred_check_branch
    %54 = sbr.rel (0) target = $region61
  $region60: #{inception_resnet_a.1} parent=0 // pred_region
    _
  $region61: #{inception_resnet_a.1} parent=0 // pred_fallthru
    _
  // Predicated region
  $region62: #{inception_resnet_a.1} parent=0 // pred_check
    _
  $region63: #{inception_resnet_a.1} parent=0 // pred_check_branch
    %56 = sbr.rel (0) target = $region65
  $region64: #{inception_resnet_a.1} parent=0 // pred_region
    _
  $region65: #{inception_resnet_a.1} parent=0 // pred_fallthru
    _
  // Predicated region
  $region66: #{inception_resnet_a.1} parent=0 // pred_check
    _
  $region67: #{inception_resnet_a.1} parent=0 // pred_check_branch
    %58 = sbr.rel (0) target = $region69
  $region68: #{inception_resnet_a.1} parent=0 // pred_region
    _
  $region69: #{inception_resnet_a.1} parent=0 // pred_fallthru
    _
  // Predicated region
  $region70: #{inception_resnet_a.1} parent=0 // pred_check
    _
  $region71: #{inception_resnet_a.1} parent=0 // pred_check_branch
    %60 = sbr.rel (0) target = $region73
  $region72: #{inception_resnet_a.1} parent=0 // pred_region
    _
  $region73: #{inception_resnet_a.1} parent=0 // pred_fallthru
    _
  // Predicated region
  $region74: #{inception_resnet_a.1} parent=0 // pred_check
    _
  $region75: #{inception_resnet_a.1} parent=0 // pred_check_branch
    %62 = sbr.rel (0) target = $region77
  $region76: #{inception_resnet_a.1} parent=0 // pred_region
    _
  $region77: #{inception_resnet_a.1} parent=0 // pred_fallthru
    _
  // Predicated region
  $region78: #{inception_resnet_a.1} parent=0 // pred_check
    _
  $region79: #{inception_resnet_a.1} parent=0 // pred_check_branch
    %64 = sbr.rel (0) target = $region81
  $region80: #{inception_resnet_a.1} parent=0 // pred_region
    _
  $region81: #{inception_resnet_a.1} parent=0 // pred_fallthru
    _
  %v66 = vld [vmem:[%s1] sm:$0xff]
  %v67 = vld [vmem:[%s1 + $0x8] sm:$0xff]
  %v68 = vld [vmem:[%s1 + $0x10] sm:$0xff]
  %v69 = vld [vmem:[%s1 + $0x18] sm:$0xff]
  %v70 = vld [vmem:[%s1 + $0x20] sm:$0xff]
  %v71 = vld [vmem:[%s1 + $0x28] sm:$0xff]
  %v72 = vld [vmem:[%s1 + $0x30] sm:$0xff]
  %v73 = vld [vmem:[%s1 + $0x38] sm:$0xff]
  %v74 = vld [vmem:[%s1 + $0x40] sm:$0xff]
  %v75 = vld [vmem:[%s1 + $0x48] sm:$0xff]
  %v76 = vld [vmem:[%s1 + $0x50] sm:$0xff]
  %v77 = vld [vmem:[%s1 + $0x58] sm:$0xff]
  %v78 = vld [vmem:[%s1 + $0x60] sm:$0xff]
  %v79 = vld [vmem:[%s1 + $0x68] sm:$0xff]
  %v80 = vld [vmem:[%s1 + $0x70] sm:$0xff]
  %v81 = vld [vmem:[%s1 + $0x78] sm:$0xff]
  %v82 = vld [vmem:[%s2] sm:$0xff]
  %v83 = vld [vmem:[%s2 + $0x8] sm:$0xff]
  %v84 = vld [vmem:[%s2 + $0x10] sm:$0xff]
  %v85 = vld [vmem:[%s2 + $0x18] sm:$0xff]
  %v86 = vld [vmem:[%s2 + $0x20] sm:$0xff]
  %v87 = vld [vmem:[%s2 + $0x28] sm:$0xff]
  %v88 = vld [vmem:[%s2 + $0x30] sm:$0xff]
  %v89 = vld [vmem:[%s2 + $0x38] sm:$0xff]
  %v90 = vld [vmem:[%s2 + $0x40] sm:$0xff]
  %v91 = vld [vmem:[%s2 + $0x48] sm:$0xff]
  %v92 = vld [vmem:[%s2 + $0x50] sm:$0xff]
  %v93 = vld [vmem:[%s2 + $0x58] sm:$0xff]
  %v94 = vld [vmem:[%s2 + $0x60] sm:$0xff]
  %v95 = vld [vmem:[%s2 + $0x68] sm:$0xff]
  %v96 = vld [vmem:[%s2 + $0x70] sm:$0xff]
  %v97 = vld [vmem:[%s2 + $0x78] sm:$0xff]
  %v98 = vld [vmem:[%s0] sm:$0xf]
  %v99 = vld [vmem:[%s0 + $0x4] sm:$0xf]
  %v100 = vld [vmem:[%s0 + $0x8] sm:$0xf]
  %v101 = vld [vmem:[%s0 + $0xc] sm:$0xf]
  %v102 = vld [vmem:[%s0 + $0x10] sm:$0xf]
  %v103 = vld [vmem:[%s0 + $0x14] sm:$0xf]
  %v104 = vld [vmem:[%s0 + $0x18] sm:$0xf]
  %v105 = vld [vmem:[%s0 + $0x1c] sm:$0xf]
  %v106 = vld [vmem:[%s0 + $0x20] sm:$0xf]
  %v107 = vld [vmem:[%s0 + $0x24] sm:$0xf]
  %v108 = vld [vmem:[%s0 + $0x28] sm:$0xf]
  %v109 = vld [vmem:[%s0 + $0x2c] sm:$0xf]
  %v110 = vld [vmem:[%s0 + $0x30] sm:$0xf]
  %v111 = vld [vmem:[%s0 + $0x34] sm:$0xf]
  %v112 = vld [vmem:[%s0 + $0x38] sm:$0xf]
  %v113 = vld [vmem:[%s0 + $0x3c] sm:$0xf]
  %v114 = vld [vmem:[%s3] sm:$0xff]
  %v131 = vunpack.c.l.b16 %v98
  %v132 = vunpack.c.l.b16 %v99
  %v133 = vunpack.c.l.b16 %v100
  %v134 = vunpack.c.l.b16 %v101
  %v135 = vunpack.c.l.b16 %v102
  %v136 = vunpack.c.l.b16 %v103
  %v137 = vunpack.c.l.b16 %v104
  %v138 = vunpack.c.l.b16 %v105
  %v139 = vunpack.c.l.b16 %v106
  %v140 = vunpack.c.l.b16 %v107
  %v141 = vunpack.c.l.b16 %v108
  %v142 = vunpack.c.l.b16 %v109
  %v143 = vunpack.c.l.b16 %v110
  %v144 = vunpack.c.l.b16 %v111
  %v145 = vunpack.c.l.b16 %v112
  %v146 = vunpack.c.l.b16 %v113
  %v147 = vpack.c.b16 %v132, %v131
  %v148 = vpack.c.b16 %v134, %v133
  %v149 = vpack.c.b16 %v136, %v135
  %v150 = vpack.c.b16 %v138, %v137
  %v151 = vpack.c.b16 %v140, %v139
  %v152 = vpack.c.b16 %v142, %v141
  %v153 = vpack.c.b16 %v144, %v143
  %v154 = vpack.c.b16 %v146, %v145
  %v156 = vunpack.c.l.b16 %v114
  %v157 = vunpack.c.h.b16 %v114
  %v158 = vpack.c.b16 %v156, %v156
  %v159 = vpack.c.b16 %v157, %v157
  %vm160 = vcmask 64512
  %v162 = vsel %vm160, %v147, 0
  %v165 = vsel %vm160, %v148, 0
  %v168 = vsel %vm160, %v149, 0
  %v171 = vsel %vm160, %v150, 0
  %v174 = vsel %vm160, %v151, 0
  %v177 = vsel %vm160, %v152, 0
  %v180 = vsel %vm160, %v153, 0
  %v183 = vsel %vm160, %v154, 0
  %vm185 = vcmask 1043456
  %v187 = vsel %vm185, %v158, 0
  %v190 = vsel %vm185, %v159, 0
  %192 = vmatprep.subr.bf16.mxu0 %v190
  %193 = vmatpush1.bf16.msra.mxu0 %v187
  %194 = vmatprep.subr.bf16.mxu0 0
  %195 = vmatpush1.bf16.msra.mxu0 0
  %196 = vmatprep.subr.bf16.mxu0 0
  %197 = vmatpush1.bf16.msra.mxu0 0
  %198 = vmatprep.subr.bf16.mxu0 0
  %199 = vmatpush1.bf16.msra.mxu0 0
  %200 = vmatprep.subr.bf16.mxu0 0
  %201 = vmatpush1.bf16.msra.mxu0 0
  %202 = vmatprep.subr.bf16.mxu0 0
  %203 = vmatpush1.bf16.msra.mxu0 0
  %204 = vmatprep.subr.bf16.mxu0 0
  %205 = vmatpush1.bf16.msra.mxu0 0
  %206 = vmatprep.subr.bf16.mxu0 0
  %207 = vmatpush1.bf16.msra.mxu0 0
  %208 = vmatprep.subr.bf16.mxu0 0
  %209 = vmatpush1.bf16.msra.mxu0 0
  %210 = vmatprep.subr.bf16.mxu0 0
  %211 = vmatpush1.bf16.msra.mxu0 0
  %212 = vmatprep.subr.bf16.mxu0 0
  %213 = vmatpush1.bf16.msra.mxu0 0
  %214 = vmatprep.subr.bf16.mxu0 0
  %215 = vmatpush1.bf16.msra.mxu0 0
  %216 = vmatprep.subr.bf16.mxu0 0
  %217 = vmatpush1.bf16.msra.mxu0 0
  %218 = vmatprep.subr.bf16.mxu0 0
  %219 = vmatpush1.bf16.msra.mxu0 0
  %220 = vmatprep.subr.bf16.mxu0 0
  %221 = vmatpush1.bf16.msra.mxu0 0
  %222 = vmatprep.subr.bf16.mxu0 0
  %223 = vmatpush1.bf16.msra.mxu0 0
  %224 = vmatprep.mubr.bf16.mxu0 0
  %225 = vmatmul.mubr.bf16.gmra.mrb[0].mxu0 %v162
  %v226 = vpop.f32.mrb[0].mxu0
  %v227 = vadd.f32 0.0, %v226
  %v228 = vpop.f32.mrb[0].mxu0
  %v229 = vadd.f32 0.0, %v228
  %v230 = vpop.f32.mrb[0].mxu0
  %v231 = vadd.f32 0.0, %v230
  %v232 = vpop.f32.mrb[0].mxu0
  %v233 = vadd.f32 0.0, %v232
  %234 = vmatprep.mubr.bf16.mxu0 0
  %235 = vmatmul.mubr.bf16.gmra.mrb[0].mxu0 %v165
  %v236 = vpop.f32.mrb[0].mxu0
  %v237 = vadd.f32 0.0, %v236
  %v238 = vpop.f32.mrb[0].mxu0
  %v239 = vadd.f32 0.0, %v238
  %v240 = vpop.f32.mrb[0].mxu0
  %v241 = vadd.f32 0.0, %v240
  %v242 = vpop.f32.mrb[0].mxu0
  %v243 = vadd.f32 0.0, %v242
  %244 = vmatprep.mubr.bf16.mxu0 0
  %245 = vmatmul.mubr.bf16.gmra.mrb[0].mxu0 %v168
  %v246 = vpop.f32.mrb[0].mxu0
  %v247 = vadd.f32 0.0, %v246
  %v248 = vpop.f32.mrb[0].mxu0
  %v249 = vadd.f32 0.0, %v248
  %v250 = vpop.f32.mrb[0].mxu0
  %v251 = vadd.f32 0.0, %v250
  %v252 = vpop.f32.mrb[0].mxu0
  %v253 = vadd.f32 0.0, %v252
  %254 = vmatprep.mubr.bf16.mxu0 0
  %255 = vmatmul.mubr.bf16.gmra.mrb[0].mxu0 %v171
  %v256 = vpop.f32.mrb[0].mxu0
  %v257 = vadd.f32 0.0, %v256
  %v258 = vpop.f32.mrb[0].mxu0
  %v259 = vadd.f32 0.0, %v258
  %v260 = vpop.f32.mrb[0].mxu0
  %v261 = vadd.f32 0.0, %v260
  %v262 = vpop.f32.mrb[0].mxu0
  %v263 = vadd.f32 0.0, %v262
  %264 = vmatprep.mubr.bf16.mxu0 0
  %265 = vmatmul.mubr.bf16.gmra.mrb[0].mxu0 %v174
  %v266 = vpop.f32.mrb[0].mxu0
  %v267 = vadd.f32 0.0, %v266
  %v268 = vpop.f32.mrb[0].mxu0
  %v269 = vadd.f32 0.0, %v268
  %v270 = vpop.f32.mrb[0].mxu0
  %v271 = vadd.f32 0.0, %v270
  %v272 = vpop.f32.mrb[0].mxu0
  %v273 = vadd.f32 0.0, %v272
  %274 = vmatprep.mubr.bf16.mxu0 0
  %275 = vmatmul.mubr.bf16.gmra.mrb[0].mxu0 %v177
  %v276 = vpop.f32.mrb[0].mxu0
  %v277 = vadd.f32 0.0, %v276
  %v278 = vpop.f32.mrb[0].mxu0
  %v279 = vadd.f32 0.0, %v278
  %v280 = vpop.f32.mrb[0].mxu0
  %v281 = vadd.f32 0.0, %v280
  %v282 = vpop.f32.mrb[0].mxu0
  %v283 = vadd.f32 0.0, %v282
  %284 = vmatprep.mubr.bf16.mxu0 0
  %285 = vmatmul.mubr.bf16.gmra.mrb[0].mxu0 %v180
  %v286 = vpop.f32.mrb[0].mxu0
  %v287 = vadd.f32 0.0, %v286
  %v288 = vpop.f32.mrb[0].mxu0
  %v289 = vadd.f32 0.0, %v288
  %v290 = vpop.f32.mrb[0].mxu0
  %v291 = vadd.f32 0.0, %v290
  %v292 = vpop.f32.mrb[0].mxu0
  %v293 = vadd.f32 0.0, %v292
  %294 = vmatprep.mubr.bf16.mxu0 0
  %295 = vmatmul.mubr.bf16.gmra.mrb[0].mxu0 %v183
  %v296 = vpop.f32.mrb[0].mxu0
  %v297 = vadd.f32 0.0, %v296
  %v298 = vpop.f32.mrb[0].mxu0
  %v299 = vadd.f32 0.0, %v298
  %v300 = vpop.f32.mrb[0].mxu0
  %v301 = vadd.f32 0.0, %v300
  %v302 = vpop.f32.mrb[0].mxu0
  %v303 = vadd.f32 0.0, %v302
  %304 = vdwg.mxu0
  %vm305 = vcmask 785408
  %v306 = vsel %vm305, %v227, 0.0
  %v307 = vsel %vm305, %v231, 0.0
  %v308 = vadd.f32 %v306, %v307
  %v309 = vsel %vm305, %v237, 0.0
  %v310 = vadd.f32 %v308, %v309
  %v311 = vsel %vm305, %v241, 0.0
  %v312 = vadd.f32 %v310, %v311
  %v313 = vsel %vm305, %v247, 0.0
  %v314 = vadd.f32 %v312, %v313
  %v315 = vsel %vm305, %v251, 0.0
  %v316 = vadd.f32 %v314, %v315
  %v317 = vsel %vm305, %v257, 0.0
  %v318 = vadd.f32 %v316, %v317
  %v319 = vsel %vm305, %v261, 0.0
  %v320 = vadd.f32 %v318, %v319
  %v321 = vsel %vm305, %v267, 0.0
  %v322 = vadd.f32 %v320, %v321
  %v323 = vsel %vm305, %v271, 0.0
  %v324 = vadd.f32 %v322, %v323
  %v325 = vsel %vm305, %v277, 0.0
  %v326 = vadd.f32 %v324, %v325
  %v327 = vsel %vm305, %v281, 0.0
  %v328 = vadd.f32 %v326, %v327
  %v329 = vsel %vm305, %v287, 0.0
  %v330 = vadd.f32 %v328, %v329
  %v331 = vsel %vm305, %v291, 0.0
  %v332 = vadd.f32 %v330, %v331
  %v333 = vsel %vm305, %v297, 0.0
  %v334 = vadd.f32 %v332, %v333
  %v335 = vsel %vm305, %v301, 0.0
  %v336 = vadd.f32 %v334, %v335
  %v337 = vrot.slane %v336, 4
  %v338 = vadd.f32 %v336, %v337
  %v339 = vrot.slane %v338, 2
  %v340 = vadd.f32 %v338, %v339
  %v341 = vrot.slane %v340, 1
  %v342 = vadd.f32 %v340, %v341
  %v343 = vrcp.pop 128.0
  %v344 = vmul.f32 %v342, %v343
  %v345 = vsub.f32 %v227, %v344
  %v346 = vsub.f32 %v231, %v344
  %v347 = vsub.f32 %v237, %v344
  %v348 = vsub.f32 %v241, %v344
  %v349 = vsub.f32 %v247, %v344
  %v350 = vsub.f32 %v251, %v344
  %v351 = vsub.f32 %v257, %v344
  %v352 = vsub.f32 %v261, %v344
  %v353 = vsub.f32 %v267, %v344
  %v354 = vsub.f32 %v271, %v344
  %v355 = vsub.f32 %v277, %v344
  %v356 = vsub.f32 %v281, %v344
  %v357 = vsub.f32 %v287, %v344
  %v358 = vsub.f32 %v291, %v344
  %v359 = vsub.f32 %v297, %v344
  %v360 = vsub.f32 %v301, %v344
  %v361 = vmul.f32 %v345, %v345
  %v362 = vmul.f32 %v346, %v346
  %v363 = vmul.f32 %v347, %v347
  %v364 = vmul.f32 %v348, %v348
  %v365 = vmul.f32 %v349, %v349
  %v366 = vmul.f32 %v350, %v350
  %v367 = vmul.f32 %v351, %v351
  %v368 = vmul.f32 %v352, %v352
  %v369 = vmul.f32 %v353, %v353
  %v370 = vmul.f32 %v354, %v354
  %v371 = vmul.f32 %v355, %v355
  %v372 = vmul.f32 %v356, %v356
  %v373 = vmul.f32 %v357, %v357
  %v374 = vmul.f32 %v358, %v358
  %v375 = vmul.f32 %v359, %v359
  %v376 = vmul.f32 %v360, %v360
  %v377 = vsel %vm305, %v361, 0.0
  %v378 = vsel %vm305, %v362, 0.0
  %v379 = vadd.f32 %v377, %v378
  %v380 = vsel %vm305, %v363, 0.0
  %v381 = vadd.f32 %v379, %v380
  %v382 = vsel %vm305, %v364, 0.0
  %v383 = vadd.f32 %v381, %v382
  %v384 = vsel %vm305, %v365, 0.0
  %v385 = vadd.f32 %v383, %v384
  %v386 = vsel %vm305, %v366, 0.0
  %v387 = vadd.f32 %v385, %v386
  %v388 = vsel %vm305, %v367, 0.0
  %v389 = vadd.f32 %v387, %v388
  %v390 = vsel %vm305, %v368, 0.0
  %v391 = vadd.f32 %v389, %v390
  %v392 = vsel %vm305, %v369, 0.0
  %v393 = vadd.f32 %v391, %v392
  %v394 = vsel %vm305, %v370, 0.0
  %v395 = vadd.f32 %v393, %v394
  %v396 = vsel %vm305, %v371, 0.0
  %v397 = vadd.f32 %v395, %v396
  %v398 = vsel %vm305, %v372, 0.0
  %v399 = vadd.f32 %v397, %v398
  %v400 = vsel %vm305, %v373, 0.0
  %v401 = vadd.f32 %v399, %v400
  %v402 = vsel %vm305, %v374, 0.0
  %v403 = vadd.f32 %v401, %v402
  %v404 = vsel %vm305, %v375, 0.0
  %v405 = vadd.f32 %v403, %v404
  %v406 = vsel %vm305, %v376, 0.0
  %v407 = vadd.f32 %v405, %v406
  %v408 = vrot.slane %v407, 4
  %v409 = vadd.f32 %v407, %v408
  %v410 = vrot.slane %v409, 2
  %v411 = vadd.f32 %v409, %v410
  %v412 = vrot.slane %v411, 1
  %v413 = vadd.f32 %v411, %v412
  %v414 = vmul.f32 %v413, %v343
  %v415 = vadd.f32 %v414, 1e-05
  %v416 = vrsqrt.pop %v415
  %v417 = vmul.f32 %v345, %v416
  %v418 = vmul.f32 %v346, %v416
  %v419 = vmul.f32 %v347, %v416
  %v420 = vmul.f32 %v348, %v416
  %v421 = vmul.f32 %v349, %v416
  %v422 = vmul.f32 %v350, %v416
  %v423 = vmul.f32 %v351, %v416
  %v424 = vmul.f32 %v352, %v416
  %v425 = vmul.f32 %v353, %v416
  %v426 = vmul.f32 %v354, %v416
  %v427 = vmul.f32 %v355, %v416
  %v428 = vmul.f32 %v356, %v416
  %v429 = vmul.f32 %v357, %v416
  %v430 = vmul.f32 %v358, %v416
  %v431 = vmul.f32 %v359, %v416
  %v432 = vmul.f32 %v360, %v416
  %v433 = vld [vmem:[%s4] sm:$0x1]
  %v435 = vlaneseq
  %v436 = vshrl.u32 %v435, 7
  %v437 = vsub.s32 0, %v436
  %v438 = vrot.slane %v433, %v437
  %v440 = vmul.f32 %v417, %v438
  %v441 = vmul.f32 %v418, %v438
  %v442 = vmul.f32 %v419, %v438
  %v443 = vmul.f32 %v420, %v438
  %v444 = vmul.f32 %v421, %v438
  %v445 = vmul.f32 %v422, %v438
  %v446 = vmul.f32 %v423, %v438
  %v447 = vmul.f32 %v424, %v438
  %v448 = vmul.f32 %v425, %v438
  %v449 = vmul.f32 %v426, %v438
  %v450 = vmul.f32 %v427, %v438
  %v451 = vmul.f32 %v428, %v438
  %v452 = vmul.f32 %v429, %v438
  %v453 = vmul.f32 %v430, %v438
  %v454 = vmul.f32 %v431, %v438
  %v455 = vmul.f32 %v432, %v438
  %v456 = vld [vmem:[%s5] sm:$0x1]
  %v458 = vlaneseq
  %v459 = vshrl.u32 %v458, 7
  %v460 = vsub.s32 0, %v459
  %v461 = vrot.slane %v456, %v460
  %v463 = vadd.f32 %v440, %v461
  %v464 = vadd.f32 %v441, %v461
  %v465 = vadd.f32 %v442, %v461
  %v466 = vadd.f32 %v443, %v461
  %v467 = vadd.f32 %v444, %v461
  %v468 = vadd.f32 %v445, %v461
  %v469 = vadd.f32 %v446, %v461
  %v470 = vadd.f32 %v447, %v461
  %v471 = vadd.f32 %v448, %v461
  %v472 = vadd.f32 %v449, %v461
  %v473 = vadd.f32 %v450, %v461
  %v474 = vadd.f32 %v451, %v461
  %v475 = vadd.f32 %v452, %v461
  %v476 = vadd.f32 %v453, %v461
  %v477 = vadd.f32 %v454, %v461
  %v478 = vadd.f32 %v455, %v461
  %v479 = vmax.f32 %v463, 0.0
  %v480 = vmax.f32 %v464, 0.0
  %v481 = vmax.f32 %v465, 0.0
  %v482 = vmax.f32 %v466, 0.0
  %v483 = vmax.f32 %v467, 0.0
  %v484 = vmax.f32 %v468, 0.0
  %v485 = vmax.f32 %v469, 0.0
  %v486 = vmax.f32 %v470, 0.0
  %v487 = vmax.f32 %v471, 0.0
  %v488 = vmax.f32 %v472, 0.0
  %v489 = vmax.f32 %v473, 0.0
  %v490 = vmax.f32 %v474, 0.0
  %v491 = vmax.f32 %v475, 0.0
  %v492 = vmax.f32 %v476, 0.0
  %v493 = vmax.f32 %v477, 0.0
  %v494 = vmax.f32 %v478, 0.0
  %v495 = vld [vmem:[%s17] sm:$0x1]
  %v497 = vlaneseq
  %v498 = vshrl.u32 %v497, 7
  %v499 = vsub.s32 0, %v498
  %v500 = vrot.slane %v495, %v499
  %v502 = vadd.f32 %v229, %v500
  %v503 = vadd.f32 %v233, %v500
  %v504 = vadd.f32 %v239, %v500
  %v505 = vadd.f32 %v243, %v500
  %v506 = vadd.f32 %v249, %v500
  %v507 = vadd.f32 %v253, %v500
  %v508 = vadd.f32 %v259, %v500
  %v509 = vadd.f32 %v263, %v500
  %v510 = vadd.f32 %v269, %v500
  %v511 = vadd.f32 %v273, %v500
  %v512 = vadd.f32 %v279, %v500
  %v513 = vadd.f32 %v283, %v500
  %v514 = vadd.f32 %v289, %v500
  %v515 = vadd.f32 %v293, %v500
  %v516 = vadd.f32 %v299, %v500
  %v517 = vadd.f32 %v303, %v500
  %534 = vrot.lane.b32.xlu0 %v479, 96
  %v535 = vpop.permute.xlu0 %534
  %536 = vrot.lane.b32.xlu0 %v480, 96
  %v537 = vpop.permute.xlu0 %536
  %538 = vrot.lane.b32.xlu0 %v481, 96
  %v539 = vpop.permute.xlu0 %538
  %540 = vrot.lane.b32.xlu0 %v482, 96
  %v541 = vpop.permute.xlu0 %540
  %542 = vrot.lane.b32.xlu0 %v483, 96
  %v543 = vpop.permute.xlu0 %542
  %544 = vrot.lane.b32.xlu0 %v484, 96
  %v545 = vpop.permute.xlu0 %544
  %546 = vrot.lane.b32.xlu0 %v485, 96
  %v547 = vpop.permute.xlu0 %546
  %548 = vrot.lane.b32.xlu0 %v486, 96
  %v549 = vpop.permute.xlu0 %548
  %550 = vrot.lane.b32.xlu0 %v487, 96
  %v551 = vpop.permute.xlu0 %550
  %552 = vrot.lane.b32.xlu0 %v488, 96
  %v553 = vpop.permute.xlu0 %552
  %554 = vrot.lane.b32.xlu0 %v489, 96
  %v555 = vpop.permute.xlu0 %554
  %556 = vrot.lane.b32.xlu0 %v490, 96
  %v557 = vpop.permute.xlu0 %556
  %558 = vrot.lane.b32.xlu0 %v491, 96
  %v559 = vpop.permute.xlu0 %558
  %560 = vrot.lane.b32.xlu0 %v492, 96
  %v561 = vpop.permute.xlu0 %560
  %562 = vrot.lane.b32.xlu0 %v493, 96
  %v563 = vpop.permute.xlu0 %562
  %564 = vrot.lane.b32.xlu0 %v494, 96
  %v565 = vpop.permute.xlu0 %564
  %v582 = vrot.slane %v535, 7
  %v583 = vrot.slane %v537, 7
  %v584 = vrot.slane %v539, 7
  %v585 = vrot.slane %v541, 7
  %v586 = vrot.slane %v543, 7
  %v587 = vrot.slane %v545, 7
  %v588 = vrot.slane %v547, 7
  %v589 = vrot.slane %v549, 7
  %v590 = vrot.slane %v551, 7
  %v591 = vrot.slane %v553, 7
  %v592 = vrot.slane %v555, 7
  %v593 = vrot.slane %v557, 7
  %v594 = vrot.slane %v559, 7
  %v595 = vrot.slane %v561, 7
  %v596 = vrot.slane %v563, 7
  %v597 = vrot.slane %v565, 7
  %v598 = vlaneseq
  %v599 = vshrl.u32 %v598, 7
  %vm600 = vcmp.lt.s32.totalorder %v599, 1
  %v601 = vsel %vm600, %v596, %v597
  %v602 = vsel %vm600, %v595, %v596
  %v603 = vsel %vm600, %v594, %v595
  %v604 = vsel %vm600, %v593, %v594
  %v605 = vsel %vm600, %v592, %v593
  %v606 = vsel %vm600, %v591, %v592
  %v607 = vsel %vm600, %v590, %v591
  %v608 = vsel %vm600, %v589, %v590
  %v609 = vsel %vm600, %v588, %v589
  %v610 = vsel %vm600, %v587, %v588
  %v611 = vsel %vm600, %v586, %v587
  %v612 = vsel %vm600, %v585, %v586
  %v613 = vsel %vm600, %v584, %v585
  %v614 = vsel %vm600, %v583, %v584
  %v615 = vsel %vm600, %v582, %v583
  %v616 = vsel %vm600, %v597, %v582
  %618 = vset.pattern.permute.xlu0 0
  %619 = vperm.xlu0 %618, %v66
  %v620 = vpop.permute.xlu0 %619
  %623 = vset.pattern.permute.xlu0 0
  %624 = vperm.xlu0 %623, %v67
  %v625 = vpop.permute.xlu0 %624
  %628 = vset.pattern.permute.xlu0 0
  %629 = vperm.xlu0 %628, %v68
  %v630 = vpop.permute.xlu0 %629
  %633 = vset.pattern.permute.xlu0 0
  %634 = vperm.xlu0 %633, %v69
  %v635 = vpop.permute.xlu0 %634
  %638 = vset.pattern.permute.xlu0 0
  %639 = vperm.xlu0 %638, %v70
  %v640 = vpop.permute.xlu0 %639
  %643 = vset.pattern.permute.xlu0 0
  %644 = vperm.xlu0 %643, %v71
  %v645 = vpop.permute.xlu0 %644
  %648 = vset.pattern.permute.xlu0 0
  %649 = vperm.xlu0 %648, %v72
  %v650 = vpop.permute.xlu0 %649
  %653 = vset.pattern.permute.xlu0 0
  %654 = vperm.xlu0 %653, %v73
  %v655 = vpop.permute.xlu0 %654
  %658 = vset.pattern.permute.xlu0 0
  %659 = vperm.xlu0 %658, %v74
  %v660 = vpop.permute.xlu0 %659
  %663 = vset.pattern.permute.xlu0 0
  %664 = vperm.xlu0 %663, %v75
  %v665 = vpop.permute.xlu0 %664
  %668 = vset.pattern.permute.xlu0 0
  %669 = vperm.xlu0 %668, %v76
  %v670 = vpop.permute.xlu0 %669
  %673 = vset.pattern.permute.xlu0 0
  %674 = vperm.xlu0 %673, %v77
  %v675 = vpop.permute.xlu0 %674
  %678 = vset.pattern.permute.xlu0 0
  %679 = vperm.xlu0 %678, %v78
  %v680 = vpop.permute.xlu0 %679
  %683 = vset.pattern.permute.xlu0 0
  %684 = vperm.xlu0 %683, %v79
  %v685 = vpop.permute.xlu0 %684
  %688 = vset.pattern.permute.xlu0 0
  %689 = vperm.xlu0 %688, %v80
  %v690 = vpop.permute.xlu0 %689
  %693 = vset.pattern.permute.xlu0 0
  %694 = vperm.xlu0 %693, %v81
  %v695 = vpop.permute.xlu0 %694
  %v697 = vmul.f32 %v616, %v620
  %v698 = vmul.f32 %v615, %v625
  %v699 = vmul.f32 %v614, %v630
  %v700 = vmul.f32 %v613, %v635
  %v701 = vmul.f32 %v612, %v640
  %v702 = vmul.f32 %v611, %v645
  %v703 = vmul.f32 %v610, %v650
  %v704 = vmul.f32 %v609, %v655
  %v705 = vmul.f32 %v608, %v660
  %v706 = vmul.f32 %v607, %v665
  %v707 = vmul.f32 %v606, %v670
  %v708 = vmul.f32 %v605, %v675
  %v709 = vmul.f32 %v604, %v680
  %v710 = vmul.f32 %v603, %v685
  %v711 = vmul.f32 %v602, %v690
  %v712 = vmul.f32 %v601, %v695
  %v713 = vrot.slane %v535, 1
  %v714 = vrot.slane %v537, 1
  %v715 = vrot.slane %v539, 1
  %v716 = vrot.slane %v541, 1
  %v717 = vrot.slane %v543, 1
  %v718 = vrot.slane %v545, 1
  %v719 = vrot.slane %v547, 1
  %v720 = vrot.slane %v549, 1
  %v721 = vrot.slane %v551, 1
  %v722 = vrot.slane %v553, 1
  %v723 = vrot.slane %v555, 1
  %v724 = vrot.slane %v557, 1
  %v725 = vrot.slane %v559, 1
  %v726 = vrot.slane %v561, 1
  %v727 = vrot.slane %v563, 1
  %v728 = vrot.slane %v565, 1
  %vm729 = vcmp.lt.s32.totalorder %v599, 7
  %v730 = vsel %vm729, %v727, %v728
  %v731 = vsel %vm729, %v726, %v727
  %v732 = vsel %vm729, %v725, %v726
  %v733 = vsel %vm729, %v724, %v725
  %v734 = vsel %vm729, %v723, %v724
  %v735 = vsel %vm729, %v722, %v723
  %v736 = vsel %vm729, %v721, %v722
  %v737 = vsel %vm729, %v720, %v721
  %v738 = vsel %vm729, %v719, %v720
  %v739 = vsel %vm729, %v718, %v719
  %v740 = vsel %vm729, %v717, %v718
  %v741 = vsel %vm729, %v716, %v717
  %v742 = vsel %vm729, %v715, %v716
  %v743 = vsel %vm729, %v714, %v715
  %v744 = vsel %vm729, %v713, %v714
  %v745 = vsel %vm729, %v728, %v713
  %747 = vset.pattern.permute.xlu0 0
  %748 = vperm.xlu0 %747, %v82
  %v749 = vpop.permute.xlu0 %748
  %752 = vset.pattern.permute.xlu0 0
  %753 = vperm.xlu0 %752, %v83
  %v754 = vpop.permute.xlu0 %753
  %757 = vset.pattern.permute.xlu0 0
  %758 = vperm.xlu0 %757, %v84
  %v759 = vpop.permute.xlu0 %758
  %762 = vset.pattern.permute.xlu0 0
  %763 = vperm.xlu0 %762, %v85
  %v764 = vpop.permute.xlu0 %763
  %767 = vset.pattern.permute.xlu0 0
  %768 = vperm.xlu0 %767, %v86
  %v769 = vpop.permute.xlu0 %768
  %772 = vset.pattern.permute.xlu0 0
  %773 = vperm.xlu0 %772, %v87
  %v774 = vpop.permute.xlu0 %773
  %777 = vset.pattern.permute.xlu0 0
  %778 = vperm.xlu0 %777, %v88
  %v779 = vpop.permute.xlu0 %778
  %782 = vset.pattern.permute.xlu0 0
  %783 = vperm.xlu0 %782, %v89
  %v784 = vpop.permute.xlu0 %783
  %787 = vset.pattern.permute.xlu0 0
  %788 = vperm.xlu0 %787, %v90
  %v789 = vpop.permute.xlu0 %788
  %792 = vset.pattern.permute.xlu0 0
  %793 = vperm.xlu0 %792, %v91
  %v794 = vpop.permute.xlu0 %793
  %797 = vset.pattern.permute.xlu0 0
  %798 = vperm.xlu0 %797, %v92
  %v799 = vpop.permute.xlu0 %798
  %802 = vset.pattern.permute.xlu0 0
  %803 = vperm.xlu0 %802, %v93
  %v804 = vpop.permute.xlu0 %803
  %807 = vset.pattern.permute.xlu0 0
  %808 = vperm.xlu0 %807, %v94
  %v809 = vpop.permute.xlu0 %808
  %812 = vset.pattern.permute.xlu0 0
  %813 = vperm.xlu0 %812, %v95
  %v814 = vpop.permute.xlu0 %813
  %817 = vset.pattern.permute.xlu0 0
  %818 = vperm.xlu0 %817, %v96
  %v819 = vpop.permute.xlu0 %818
  %822 = vset.pattern.permute.xlu0 0
  %823 = vperm.xlu0 %822, %v97
  %v824 = vpop.permute.xlu0 %823
  %v826 = vmul.f32 %v744, %v749
  %v827 = vmul.f32 %v743, %v754
  %v828 = vmul.f32 %v742, %v759
  %v829 = vmul.f32 %v741, %v764
  %v830 = vmul.f32 %v740, %v769
  %v831 = vmul.f32 %v739, %v774
  %v832 = vmul.f32 %v738, %v779
  %v833 = vmul.f32 %v737, %v784
  %v834 = vmul.f32 %v736, %v789
  %v835 = vmul.f32 %v735, %v794
  %v836 = vmul.f32 %v734, %v799
  %v837 = vmul.f32 %v733, %v804
  %v838 = vmul.f32 %v732, %v809
  %v839 = vmul.f32 %v731, %v814
  %v840 = vmul.f32 %v730, %v819
  %v841 = vmul.f32 %v745, %v824
  %858 = vrot.lane.b32.xlu0 %v826, 64
  %v859 = vpop.permute.xlu0 %858
  %860 = vrot.lane.b32.xlu0 %v827, 64
  %v861 = vpop.permute.xlu0 %860
  %862 = vrot.lane.b32.xlu0 %v828, 64
  %v863 = vpop.permute.xlu0 %862
  %864 = vrot.lane.b32.xlu0 %v829, 64
  %v865 = vpop.permute.xlu0 %864
  %866 = vrot.lane.b32.xlu0 %v830, 64
  %v867 = vpop.permute.xlu0 %866
  %868 = vrot.lane.b32.xlu0 %v831, 64
  %v869 = vpop.permute.xlu0 %868
  %870 = vrot.lane.b32.xlu0 %v832, 64
  %v871 = vpop.permute.xlu0 %870
  %872 = vrot.lane.b32.xlu0 %v833, 64
  %v873 = vpop.permute.xlu0 %872
  %874 = vrot.lane.b32.xlu0 %v834, 64
  %v875 = vpop.permute.xlu0 %874
  %876 = vrot.lane.b32.xlu0 %v835, 64
  %v877 = vpop.permute.xlu0 %876
  %878 = vrot.lane.b32.xlu0 %v836, 64
  %v879 = vpop.permute.xlu0 %878
  %880 = vrot.lane.b32.xlu0 %v837, 64
  %v881 = vpop.permute.xlu0 %880
  %882 = vrot.lane.b32.xlu0 %v838, 64
  %v883 = vpop.permute.xlu0 %882
  %884 = vrot.lane.b32.xlu0 %v839, 64
  %v885 = vpop.permute.xlu0 %884
  %886 = vrot.lane.b32.xlu0 %v840, 64
  %v887 = vpop.permute.xlu0 %886
  %888 = vrot.lane.b32.xlu0 %v841, 64
  %v889 = vpop.permute.xlu0 %888
  %vm906 = vcmask 261120
  %v907 = vsel %vm906, %v697, %v479
  %v908 = vsel %vm906, %v698, %v480
  %v909 = vsel %vm906, %v699, %v481
  %v910 = vsel %vm906, %v700, %v482
  %v911 = vsel %vm906, %v701, %v483
  %v912 = vsel %vm906, %v702, %v484
  %v913 = vsel %vm906, %v703, %v485
  %v914 = vsel %vm906, %v704, %v486
  %v915 = vsel %vm906, %v705, %v487
  %v916 = vsel %vm906, %v706, %v488
  %v917 = vsel %vm906, %v707, %v489
  %v918 = vsel %vm906, %v708, %v490
  %v919 = vsel %vm906, %v709, %v491
  %v920 = vsel %vm906, %v710, %v492
  %v921 = vsel %vm906, %v711, %v493
  %v922 = vsel %vm906, %v712, %v494
  %vm923 = vcmask 523264
  %v924 = vsel %vm923, %v907, %v859
  %v925 = vsel %vm923, %v908, %v861
  %v926 = vsel %vm923, %v909, %v863
  %v927 = vsel %vm923, %v910, %v865
  %v928 = vsel %vm923, %v911, %v867
  %v929 = vsel %vm923, %v912, %v869
  %v930 = vsel %vm923, %v913, %v871
  %v931 = vsel %vm923, %v914, %v873
  %v932 = vsel %vm923, %v915, %v875
  %v933 = vsel %vm923, %v916, %v877
  %v934 = vsel %vm923, %v917, %v879
  %v935 = vsel %vm923, %v918, %v881
  %v936 = vsel %vm923, %v919, %v883
  %v937 = vsel %vm923, %v920, %v885
  %v938 = vsel %vm923, %v921, %v887
  %v939 = vsel %vm923, %v922, %v889
  %v940 = vpack.c.bf16 %v925, %v924
  %v941 = vpack.c.bf16 %v927, %v926
  %v942 = vpack.c.bf16 %v929, %v928
  %v943 = vpack.c.bf16 %v931, %v930
  %v944 = vpack.c.bf16 %v933, %v932
  %v945 = vpack.c.bf16 %v935, %v934
  %v946 = vpack.c.bf16 %v937, %v936
  %v947 = vpack.c.bf16 %v939, %v938
  %v948 = vld [vmem:[%s6] sm:$0xf]
  %v949 = vld [vmem:[%s6 + $0x4] sm:$0xf]
  %v950 = vld [vmem:[%s6 + $0x8] sm:$0xf]
  %v951 = vld [vmem:[%s6 + $0xc] sm:$0xf]
  %v952 = vld [vmem:[%s6 + $0x10] sm:$0xf]
  %v953 = vld [vmem:[%s6 + $0x14] sm:$0xf]
  %v954 = vld [vmem:[%s6 + $0x18] sm:$0xf]
  %v955 = vld [vmem:[%s6 + $0x1c] sm:$0xf]
  %v956 = vld [vmem:[%s6 + $0x20] sm:$0xf]
  %v957 = vld [vmem:[%s6 + $0x24] sm:$0xf]
  %v958 = vld [vmem:[%s6 + $0x28] sm:$0xf]
  %v959 = vld [vmem:[%s6 + $0x2c] sm:$0xf]
  %v972 = vunpack.c.l.b16 %v948
  %v973 = vunpack.c.l.b16 %v949
  %v974 = vunpack.c.l.b16 %v950
  %v975 = vunpack.c.l.b16 %v951
  %v976 = vunpack.c.l.b16 %v952
  %v977 = vunpack.c.l.b16 %v953
  %v978 = vunpack.c.l.b16 %v954
  %v979 = vunpack.c.l.b16 %v955
  %v980 = vunpack.c.l.b16 %v956
  %v981 = vunpack.c.l.b16 %v957
  %v982 = vunpack.c.l.b16 %v958
  %v983 = vunpack.c.l.b16 %v959
  %v984 = vpack.c.b16 %v973, %v972
  %v985 = vpack.c.b16 %v975, %v974
  %v986 = vpack.c.b16 %v977, %v976
  %v987 = vpack.c.b16 %v979, %v978
  %v988 = vpack.c.b16 %v981, %v980
  %v989 = vpack.c.b16 %v983, %v982
  %v997 = vsel %vm305, %v940, 0
  %v1000 = vsel %vm305, %v941, 0
  %v1003 = vsel %vm305, %v942, 0
  %v1006 = vsel %vm305, %v943, 0
  %v1009 = vsel %vm305, %v944, 0
  %v1012 = vsel %vm305, %v945, 0
  %v1015 = vsel %vm305, %v946, 0
  %v1018 = vsel %vm305, %v947, 0
  %1020 = vmatprep.subr.bf16.mxu0 0
  %1021 = vmatpush1.bf16.msra.mxu0 %v984
  %1022 = vmatprep.subr.bf16.mxu0 0
  %1023 = vmatpush1.bf16.msra.mxu0 %v985
  %1024 = vmatprep.subr.bf16.mxu0 0
  %1025 = vmatpush1.bf16.msra.mxu0 %v986
  %1026 = vmatprep.subr.bf16.mxu0 0
  %1027 = vmatpush1.bf16.msra.mxu0 %v987
  %1028 = vmatprep.subr.bf16.mxu0 0
  %1029 = vmatpush1.bf16.msra.mxu0 %v988
  %1030 = vmatprep.subr.bf16.mxu0 0
  %1031 = vmatpush1.bf16.msra.mxu0 %v989
  %1032 = vmatprep.subr.bf16.mxu0 0
  %1033 = vmatpush1.bf16.msra.mxu0 0
  %1034 = vmatprep.subr.bf16.mxu0 0
  %1035 = vmatpush1.bf16.msra.mxu0 0
  %1036 = vmatprep.subr.bf16.mxu0 0
  %1037 = vmatpush1.bf16.msra.mxu0 0
  %1038 = vmatprep.subr.bf16.mxu0 0
  %1039 = vmatpush1.bf16.msra.mxu0 0
  %1040 = vmatprep.subr.bf16.mxu0 0
  %1041 = vmatpush1.bf16.msra.mxu0 0
  %1042 = vmatprep.subr.bf16.mxu0 0
  %1043 = vmatpush1.bf16.msra.mxu0 0
  %1044 = vmatprep.subr.bf16.mxu0 0
  %1045 = vmatpush1.bf16.msra.mxu0 0
  %1046 = vmatprep.subr.bf16.mxu0 0
  %1047 = vmatpush1.bf16.msra.mxu0 0
  %1048 = vmatprep.subr.bf16.mxu0 0
  %1049 = vmatpush1.bf16.msra.mxu0 0
  %1050 = vmatprep.subr.bf16.mxu0 0
  %1051 = vmatpush1.bf16.msra.mxu0 0
  %1052 = vmatprep.mubr.bf16.mxu0 0
  %1053 = vmatmul.mubr.bf16.gmra.mrb[0].mxu0 %v997
  %v1054 = vpop.f32.mrb[0].mxu0
  %v1055 = vadd.f32 0.0, %v1054
  %v1056 = vpop.f32.mrb[0].mxu0
  %v1057 = vpop.f32.mrb[0].mxu0
  %v1058 = vadd.f32 0.0, %v1057
  %v1059 = vpop.f32.mrb[0].mxu0
  %1060 = vmatprep.mubr.bf16.mxu0 0
  %1061 = vmatmul.mubr.bf16.gmra.mrb[0].mxu0 %v1000
  %v1062 = vpop.f32.mrb[0].mxu0
  %v1063 = vadd.f32 0.0, %v1062
  %v1064 = vpop.f32.mrb[0].mxu0
  %v1065 = vpop.f32.mrb[0].mxu0
  %v1066 = vadd.f32 0.0, %v1065
  %v1067 = vpop.f32.mrb[0].mxu0
  %1068 = vmatprep.mubr.bf16.mxu0 0
  %1069 = vmatmul.mubr.bf16.gmra.mrb[0].mxu0 %v1003
  %v1070 = vpop.f32.mrb[0].mxu0
  %v1071 = vadd.f32 0.0, %v1070
  %v1072 = vpop.f32.mrb[0].mxu0
  %v1073 = vpop.f32.mrb[0].mxu0
  %v1074 = vadd.f32 0.0, %v1073
  %v1075 = vpop.f32.mrb[0].mxu0
  %1076 = vmatprep.mubr.bf16.mxu0 0
  %1077 = vmatmul.mubr.bf16.gmra.mrb[0].mxu0 %v1006
  %v1078 = vpop.f32.mrb[0].mxu0
  %v1079 = vadd.f32 0.0, %v1078
  %v1080 = vpop.f32.mrb[0].mxu0
  %v1081 = vpop.f32.mrb[0].mxu0
  %v1082 = vadd.f32 0.0, %v1081
  %v1083 = vpop.f32.mrb[0].mxu0
  %1084 = vmatprep.mubr.bf16.mxu0 0
  %1085 = vmatmul.mubr.bf16.gmra.mrb[0].mxu0 %v1009
  %v1086 = vpop.f32.mrb[0].mxu0
  %v1087 = vadd.f32 0.0, %v1086
  %v1088 = vpop.f32.mrb[0].mxu0
  %v1089 = vpop.f32.mrb[0].mxu0
  %v1090 = vadd.f32 0.0, %v1089
  %v1091 = vpop.f32.mrb[0].mxu0
  %1092 = vmatprep.mubr.bf16.mxu0 0
  %1093 = vmatmul.mubr.bf16.gmra.mrb[0].mxu0 %v1012
  %v1094 = vpop.f32.mrb[0].mxu0
  %v1095 = vadd.f32 0.0, %v1094
  %v1096 = vpop.f32.mrb[0].mxu0
  %v1097 = vpop.f32.mrb[0].mxu0
  %v1098 = vadd.f32 0.0, %v1097
  %v1099 = vpop.f32.mrb[0].mxu0
  %1100 = vmatprep.mubr.bf16.mxu0 0
  %1101 = vmatmul.mubr.bf16.gmra.mrb[0].mxu0 %v1015
  %v1102 = vpop.f32.mrb[0].mxu0
  %v1103 = vadd.f32 0.0, %v1102
  %v1104 = vpop.f32.mrb[0].mxu0
  %v1105 = vpop.f32.mrb[0].mxu0
  %v1106 = vadd.f32 0.0, %v1105
  %v1107 = vpop.f32.mrb[0].mxu0
  %1108 = vmatprep.mubr.bf16.mxu0 0
  %1109 = vmatmul.mubr.bf16.gmra.mrb[0].mxu0 %v1018
  %v1110 = vpop.f32.mrb[0].mxu0
  %v1111 = vadd.f32 0.0, %v1110
  %v1112 = vpop.f32.mrb[0].mxu0
  %v1113 = vpop.f32.mrb[0].mxu0
  %v1114 = vadd.f32 0.0, %v1113
  %v1115 = vpop.f32.mrb[0].mxu0
  %1116 = vdwg.mxu0
  %v1117 = vsel %vm906, %v1055, 0.0
  %v1118 = vsel %vm906, %v1058, 0.0
  %v1119 = vadd.f32 %v1117, %v1118
  %v1120 = vsel %vm906, %v1063, 0.0
  %v1121 = vadd.f32 %v1119, %v1120
  %v1122 = vsel %vm906, %v1066, 0.0
  %v1123 = vadd.f32 %v1121, %v1122
  %v1124 = vsel %vm906, %v1071, 0.0
  %v1125 = vadd.f32 %v1123, %v1124
  %v1126 = vsel %vm906, %v1074, 0.0
  %v1127 = vadd.f32 %v1125, %v1126
  %v1128 = vsel %vm906, %v1079, 0.0
  %v1129 = vadd.f32 %v1127, %v1128
  %v1130 = vsel %vm906, %v1082, 0.0
  %v1131 = vadd.f32 %v1129, %v1130
  %v1132 = vsel %vm906, %v1087, 0.0
  %v1133 = vadd.f32 %v1131, %v1132
  %v1134 = vsel %vm906, %v1090, 0.0
  %v1135 = vadd.f32 %v1133, %v1134
  %v1136 = vsel %vm906, %v1095, 0.0
  %v1137 = vadd.f32 %v1135, %v1136
  %v1138 = vsel %vm906, %v1098, 0.0
  %v1139 = vadd.f32 %v1137, %v1138
  %v1140 = vsel %vm906, %v1103, 0.0
  %v1141 = vadd.f32 %v1139, %v1140
  %v1142 = vsel %vm906, %v1106, 0.0
  %v1143 = vadd.f32 %v1141, %v1142
  %v1144 = vsel %vm906, %v1111, 0.0
  %v1145 = vadd.f32 %v1143, %v1144
  %v1146 = vsel %vm906, %v1114, 0.0
  %v1147 = vadd.f32 %v1145, %v1146
  %v1148 = vrot.slane %v1147, 4
  %v1149 = vadd.f32 %v1147, %v1148
  %v1150 = vrot.slane %v1149, 2
  %v1151 = vadd.f32 %v1149, %v1150
  %v1152 = vrot.slane %v1151, 1
  %v1153 = vadd.f32 %v1151, %v1152
  %v1154 = vmul.f32 %v1153, %v343
  %v1155 = vsub.f32 %v1055, %v1154
  %v1156 = vsub.f32 %v1058, %v1154
  %v1157 = vsub.f32 %v1063, %v1154
  %v1158 = vsub.f32 %v1066, %v1154
  %v1159 = vsub.f32 %v1071, %v1154
  %v1160 = vsub.f32 %v1074, %v1154
  %v1161 = vsub.f32 %v1079, %v1154
  %v1162 = vsub.f32 %v1082, %v1154
  %v1163 = vsub.f32 %v1087, %v1154
  %v1164 = vsub.f32 %v1090, %v1154
  %v1165 = vsub.f32 %v1095, %v1154
  %v1166 = vsub.f32 %v1098, %v1154
  %v1167 = vsub.f32 %v1103, %v1154
  %v1168 = vsub.f32 %v1106, %v1154
  %v1169 = vsub.f32 %v1111, %v1154
  %v1170 = vsub.f32 %v1114, %v1154
  %v1171 = vmul.f32 %v1155, %v1155
  %v1172 = vmul.f32 %v1156, %v1156
  %v1173 = vmul.f32 %v1157, %v1157
  %v1174 = vmul.f32 %v1158, %v1158
  %v1175 = vmul.f32 %v1159, %v1159
  %v1176 = vmul.f32 %v1160, %v1160
  %v1177 = vmul.f32 %v1161, %v1161
  %v1178 = vmul.f32 %v1162, %v1162
  %v1179 = vmul.f32 %v1163, %v1163
  %v1180 = vmul.f32 %v1164, %v1164
  %v1181 = vmul.f32 %v1165, %v1165
  %v1182 = vmul.f32 %v1166, %v1166
  %v1183 = vmul.f32 %v1167, %v1167
  %v1184 = vmul.f32 %v1168, %v1168
  %v1185 = vmul.f32 %v1169, %v1169
  %v1186 = vmul.f32 %v1170, %v1170
  %v1187 = vsel %vm906, %v1171, 0.0
  %v1188 = vsel %vm906, %v1172, 0.0
  %v1189 = vadd.f32 %v1187, %v1188
  %v1190 = vsel %vm906, %v1173, 0.0
  %v1191 = vadd.f32 %v1189, %v1190
  %v1192 = vsel %vm906, %v1174, 0.0
  %v1193 = vadd.f32 %v1191, %v1192
  %v1194 = vsel %vm906, %v1175, 0.0
  %v1195 = vadd.f32 %v1193, %v1194
  %v1196 = vsel %vm906, %v1176, 0.0
  %v1197 = vadd.f32 %v1195, %v1196
  %v1198 = vsel %vm906, %v1177, 0.0
  %v1199 = vadd.f32 %v1197, %v1198
  %v1200 = vsel %vm906, %v1178, 0.0
  %v1201 = vadd.f32 %v1199, %v1200
  %v1202 = vsel %vm906, %v1179, 0.0
  %v1203 = vadd.f32 %v1201, %v1202
  %v1204 = vsel %vm906, %v1180, 0.0
  %v1205 = vadd.f32 %v1203, %v1204
  %v1206 = vsel %vm906, %v1181, 0.0
  %v1207 = vadd.f32 %v1205, %v1206
  %v1208 = vsel %vm906, %v1182, 0.0
  %v1209 = vadd.f32 %v1207, %v1208
  %v1210 = vsel %vm906, %v1183, 0.0
  %v1211 = vadd.f32 %v1209, %v1210
  %v1212 = vsel %vm906, %v1184, 0.0
  %v1213 = vadd.f32 %v1211, %v1212
  %v1214 = vsel %vm906, %v1185, 0.0
  %v1215 = vadd.f32 %v1213, %v1214
  %v1216 = vsel %vm906, %v1186, 0.0
  %v1217 = vadd.f32 %v1215, %v1216
  %v1218 = vrot.slane %v1217, 4
  %v1219 = vadd.f32 %v1217, %v1218
  %v1220 = vrot.slane %v1219, 2
  %v1221 = vadd.f32 %v1219, %v1220
  %v1222 = vrot.slane %v1221, 1
  %v1223 = vadd.f32 %v1221, %v1222
  %v1224 = vmul.f32 %v1223, %v343
  %v1225 = vadd.f32 %v1224, 1e-05
  %v1226 = vrsqrt.pop %v1225
  %v1227 = vmul.f32 %v1155, %v1226
  %v1228 = vmul.f32 %v1156, %v1226
  %v1229 = vmul.f32 %v1157, %v1226
  %v1230 = vmul.f32 %v1158, %v1226
  %v1231 = vmul.f32 %v1159, %v1226
  %v1232 = vmul.f32 %v1160, %v1226
  %v1233 = vmul.f32 %v1161, %v1226
  %v1234 = vmul.f32 %v1162, %v1226
  %v1235 = vmul.f32 %v1163, %v1226
  %v1236 = vmul.f32 %v1164, %v1226
  %v1237 = vmul.f32 %v1165, %v1226
  %v1238 = vmul.f32 %v1166, %v1226
  %v1239 = vmul.f32 %v1167, %v1226
  %v1240 = vmul.f32 %v1168, %v1226
  %v1241 = vmul.f32 %v1169, %v1226
  %v1242 = vmul.f32 %v1170, %v1226
  %v1243 = vld [vmem:[%s7] sm:$0x1]
  %v1245 = vlaneseq
  %v1246 = vshrl.u32 %v1245, 7
  %v1247 = vsub.s32 0, %v1246
  %v1248 = vrot.slane %v1243, %v1247
  %v1250 = vmul.f32 %v1227, %v1248
  %v1251 = vmul.f32 %v1228, %v1248
  %v1252 = vmul.f32 %v1229, %v1248
  %v1253 = vmul.f32 %v1230, %v1248
  %v1254 = vmul.f32 %v1231, %v1248
  %v1255 = vmul.f32 %v1232, %v1248
  %v1256 = vmul.f32 %v1233, %v1248
  %v1257 = vmul.f32 %v1234, %v1248
  %v1258 = vmul.f32 %v1235, %v1248
  %v1259 = vmul.f32 %v1236, %v1248
  %v1260 = vmul.f32 %v1237, %v1248
  %v1261 = vmul.f32 %v1238, %v1248
  %v1262 = vmul.f32 %v1239, %v1248
  %v1263 = vmul.f32 %v1240, %v1248
  %v1264 = vmul.f32 %v1241, %v1248
  %v1265 = vmul.f32 %v1242, %v1248
  %v1266 = vld [vmem:[%s8] sm:$0x1]
  %v1268 = vlaneseq
  %v1269 = vshrl.u32 %v1268, 7
  %v1270 = vsub.s32 0, %v1269
  %v1271 = vrot.slane %v1266, %v1270
  %v1273 = vadd.f32 %v1250, %v1271
  %v1274 = vadd.f32 %v1251, %v1271
  %v1275 = vadd.f32 %v1252, %v1271
  %v1276 = vadd.f32 %v1253, %v1271
  %v1277 = vadd.f32 %v1254, %v1271
  %v1278 = vadd.f32 %v1255, %v1271
  %v1279 = vadd.f32 %v1256, %v1271
  %v1280 = vadd.f32 %v1257, %v1271
  %v1281 = vadd.f32 %v1258, %v1271
  %v1282 = vadd.f32 %v1259, %v1271
  %v1283 = vadd.f32 %v1260, %v1271
  %v1284 = vadd.f32 %v1261, %v1271
  %v1285 = vadd.f32 %v1262, %v1271
  %v1286 = vadd.f32 %v1263, %v1271
  %v1287 = vadd.f32 %v1264, %v1271
  %v1288 = vadd.f32 %v1265, %v1271
  %v1289 = vmax.f32 %v1273, 0.0
  %v1290 = vmax.f32 %v1274, 0.0
  %v1291 = vmax.f32 %v1275, 0.0
  %v1292 = vmax.f32 %v1276, 0.0
  %v1293 = vmax.f32 %v1277, 0.0
  %v1294 = vmax.f32 %v1278, 0.0
  %v1295 = vmax.f32 %v1279, 0.0
  %v1296 = vmax.f32 %v1280, 0.0
  %v1297 = vmax.f32 %v1281, 0.0
  %v1298 = vmax.f32 %v1282, 0.0
  %v1299 = vmax.f32 %v1283, 0.0
  %v1300 = vmax.f32 %v1284, 0.0
  %v1301 = vmax.f32 %v1285, 0.0
  %v1302 = vmax.f32 %v1286, 0.0
  %v1303 = vmax.f32 %v1287, 0.0
  %v1304 = vmax.f32 %v1288, 0.0
  %1305 = vrot.lane.b32.xlu0 %v479, 64
  %v1306 = vpop.permute.xlu0 %1305
  %1307 = vrot.lane.b32.xlu0 %v480, 64
  %v1308 = vpop.permute.xlu0 %1307
  %1309 = vrot.lane.b32.xlu0 %v481, 64
  %v1310 = vpop.permute.xlu0 %1309
  %1311 = vrot.lane.b32.xlu0 %v482, 64
  %v1312 = vpop.permute.xlu0 %1311
  %1313 = vrot.lane.b32.xlu0 %v483, 64
  %v1314 = vpop.permute.xlu0 %1313
  %1315 = vrot.lane.b32.xlu0 %v484, 64
  %v1316 = vpop.permute.xlu0 %1315
  %1317 = vrot.lane.b32.xlu0 %v485, 64
  %v1318 = vpop.permute.xlu0 %1317
  %1319 = vrot.lane.b32.xlu0 %v486, 64
  %v1320 = vpop.permute.xlu0 %1319
  %1321 = vrot.lane.b32.xlu0 %v487, 64
  %v1322 = vpop.permute.xlu0 %1321
  %1323 = vrot.lane.b32.xlu0 %v488, 64
  %v1324 = vpop.permute.xlu0 %1323
  %1325 = vrot.lane.b32.xlu0 %v489, 64
  %v1326 = vpop.permute.xlu0 %1325
  %1327 = vrot.lane.b32.xlu0 %v490, 64
  %v1328 = vpop.permute.xlu0 %1327
  %1329 = vrot.lane.b32.xlu0 %v491, 64
  %v1330 = vpop.permute.xlu0 %1329
  %1331 = vrot.lane.b32.xlu0 %v492, 64
  %v1332 = vpop.permute.xlu0 %1331
  %1333 = vrot.lane.b32.xlu0 %v493, 64
  %v1334 = vpop.permute.xlu0 %1333
  %1335 = vrot.lane.b32.xlu0 %v494, 64
  %v1336 = vpop.permute.xlu0 %1335
  %v1353 = vrot.slane %v1306, 7
  %v1354 = vrot.slane %v1308, 7
  %v1355 = vrot.slane %v1310, 7
  %v1356 = vrot.slane %v1312, 7
  %v1357 = vrot.slane %v1314, 7
  %v1358 = vrot.slane %v1316, 7
  %v1359 = vrot.slane %v1318, 7
  %v1360 = vrot.slane %v1320, 7
  %v1361 = vrot.slane %v1322, 7
  %v1362 = vrot.slane %v1324, 7
  %v1363 = vrot.slane %v1326, 7
  %v1364 = vrot.slane %v1328, 7
  %v1365 = vrot.slane %v1330, 7
  %v1366 = vrot.slane %v1332, 7
  %v1367 = vrot.slane %v1334, 7
  %v1368 = vrot.slane %v1336, 7
  %v1369 = vsel %vm600, %v1367, %v1368
  %v1370 = vsel %vm600, %v1366, %v1367
  %v1371 = vsel %vm600, %v1365, %v1366
  %v1372 = vsel %vm600, %v1364, %v1365
  %v1373 = vsel %vm600, %v1363, %v1364
  %v1374 = vsel %vm600, %v1362, %v1363
  %v1375 = vsel %vm600, %v1361, %v1362
  %v1376 = vsel %vm600, %v1360, %v1361
  %v1377 = vsel %vm600, %v1359, %v1360
  %v1378 = vsel %vm600, %v1358, %v1359
  %v1379 = vsel %vm600, %v1357, %v1358
  %v1380 = vsel %vm600, %v1356, %v1357
  %v1381 = vsel %vm600, %v1355, %v1356
  %v1382 = vsel %vm600, %v1354, %v1355
  %v1383 = vsel %vm600, %v1353, %v1354
  %v1384 = vsel %vm600, %v1368, %v1353
  %v1385 = vmul.f32 %v1384, %v620
  %v1386 = vmul.f32 %v1383, %v625
  %v1387 = vmul.f32 %v1382, %v630
  %v1388 = vmul.f32 %v1381, %v635
  %v1389 = vmul.f32 %v1380, %v640
  %v1390 = vmul.f32 %v1379, %v645
  %v1391 = vmul.f32 %v1378, %v650
  %v1392 = vmul.f32 %v1377, %v655
  %v1393 = vmul.f32 %v1376, %v660
  %v1394 = vmul.f32 %v1375, %v665
  %v1395 = vmul.f32 %v1374, %v670
  %v1396 = vmul.f32 %v1373, %v675
  %v1397 = vmul.f32 %v1372, %v680
  %v1398 = vmul.f32 %v1371, %v685
  %v1399 = vmul.f32 %v1370, %v690
  %v1400 = vmul.f32 %v1369, %v695
  %v1401 = vrot.slane %v1306, 1
  %v1402 = vrot.slane %v1308, 1
  %v1403 = vrot.slane %v1310, 1
  %v1404 = vrot.slane %v1312, 1
  %v1405 = vrot.slane %v1314, 1
  %v1406 = vrot.slane %v1316, 1
  %v1407 = vrot.slane %v1318, 1
  %v1408 = vrot.slane %v1320, 1
  %v1409 = vrot.slane %v1322, 1
  %v1410 = vrot.slane %v1324, 1
  %v1411 = vrot.slane %v1326, 1
  %v1412 = vrot.slane %v1328, 1
  %v1413 = vrot.slane %v1330, 1
  %v1414 = vrot.slane %v1332, 1
  %v1415 = vrot.slane %v1334, 1
  %v1416 = vrot.slane %v1336, 1
  %v1417 = vsel %vm729, %v1415, %v1416
  %v1418 = vsel %vm729, %v1414, %v1415
  %v1419 = vsel %vm729, %v1413, %v1414
  %v1420 = vsel %vm729, %v1412, %v1413
  %v1421 = vsel %vm729, %v1411, %v1412
  %v1422 = vsel %vm729, %v1410, %v1411
  %v1423 = vsel %vm729, %v1409, %v1410
  %v1424 = vsel %vm729, %v1408, %v1409
  %v1425 = vsel %vm729, %v1407, %v1408
  %v1426 = vsel %vm729, %v1406, %v1407
  %v1427 = vsel %vm729, %v1405, %v1406
  %v1428 = vsel %vm729, %v1404, %v1405
  %v1429 = vsel %vm729, %v1403, %v1404
  %v1430 = vsel %vm729, %v1402, %v1403
  %v1431 = vsel %vm729, %v1401, %v1402
  %v1432 = vsel %vm729, %v1416, %v1401
  %v1433 = vmul.f32 %v1431, %v749
  %v1434 = vmul.f32 %v1430, %v754
  %v1435 = vmul.f32 %v1429, %v759
  %v1436 = vmul.f32 %v1428, %v764
  %v1437 = vmul.f32 %v1427, %v769
  %v1438 = vmul.f32 %v1426, %v774
  %v1439 = vmul.f32 %v1425, %v779
  %v1440 = vmul.f32 %v1424, %v784
  %v1441 = vmul.f32 %v1423, %v789
  %v1442 = vmul.f32 %v1422, %v794
  %v1443 = vmul.f32 %v1421, %v799
  %v1444 = vmul.f32 %v1420, %v804
  %v1445 = vmul.f32 %v1419, %v809
  %v1446 = vmul.f32 %v1418, %v814
  %v1447 = vmul.f32 %v1417, %v819
  %v1448 = vmul.f32 %v1432, %v824
  %1465 = vrot.lane.b32.xlu0 %v1433, 64
  %v1466 = vpop.permute.xlu0 %1465
  %1467 = vrot.lane.b32.xlu0 %v1434, 64
  %v1468 = vpop.permute.xlu0 %1467
  %1469 = vrot.lane.b32.xlu0 %v1435, 64
  %v1470 = vpop.permute.xlu0 %1469
  %1471 = vrot.lane.b32.xlu0 %v1436, 64
  %v1472 = vpop.permute.xlu0 %1471
  %1473 = vrot.lane.b32.xlu0 %v1437, 64
  %v1474 = vpop.permute.xlu0 %1473
  %1475 = vrot.lane.b32.xlu0 %v1438, 64
  %v1476 = vpop.permute.xlu0 %1475
  %1477 = vrot.lane.b32.xlu0 %v1439, 64
  %v1478 = vpop.permute.xlu0 %1477
  %1479 = vrot.lane.b32.xlu0 %v1440, 64
  %v1480 = vpop.permute.xlu0 %1479
  %1481 = vrot.lane.b32.xlu0 %v1441, 64
  %v1482 = vpop.permute.xlu0 %1481
  %1483 = vrot.lane.b32.xlu0 %v1442, 64
  %v1484 = vpop.permute.xlu0 %1483
  %1485 = vrot.lane.b32.xlu0 %v1443, 64
  %v1486 = vpop.permute.xlu0 %1485
  %1487 = vrot.lane.b32.xlu0 %v1444, 64
  %v1488 = vpop.permute.xlu0 %1487
  %1489 = vrot.lane.b32.xlu0 %v1445, 64
  %v1490 = vpop.permute.xlu0 %1489
  %1491 = vrot.lane.b32.xlu0 %v1446, 64
  %v1492 = vpop.permute.xlu0 %1491
  %1493 = vrot.lane.b32.xlu0 %v1447, 64
  %v1494 = vpop.permute.xlu0 %1493
  %1495 = vrot.lane.b32.xlu0 %v1448, 64
  %v1496 = vpop.permute.xlu0 %1495
  %v1513 = vsel %vm906, %v1385, %v535
  %v1514 = vsel %vm906, %v1386, %v537
  %v1515 = vsel %vm906, %v1387, %v539
  %v1516 = vsel %vm906, %v1388, %v541
  %v1517 = vsel %vm906, %v1389, %v543
  %v1518 = vsel %vm906, %v1390, %v545
  %v1519 = vsel %vm906, %v1391, %v547
  %v1520 = vsel %vm906, %v1392, %v549
  %v1521 = vsel %vm906, %v1393, %v551
  %v1522 = vsel %vm906, %v1394, %v553
  %v1523 = vsel %vm906, %v1395, %v555
  %v1524 = vsel %vm906, %v1396, %v557
  %v1525 = vsel %vm906, %v1397, %v559
  %v1526 = vsel %vm906, %v1398, %v561
  %v1527 = vsel %vm906, %v1399, %v563
  %v1528 = vsel %vm906, %v1400, %v565
  %v1529 = vsel %vm923, %v1513, %v1466
  %v1530 = vsel %vm923, %v1514, %v1468
  %v1531 = vsel %vm923, %v1515, %v1470
  %v1532 = vsel %vm923, %v1516, %v1472
  %v1533 = vsel %vm923, %v1517, %v1474
  %v1534 = vsel %vm923, %v1518, %v1476
  %v1535 = vsel %vm923, %v1519, %v1478
  %v1536 = vsel %vm923, %v1520, %v1480
  %v1537 = vsel %vm923, %v1521, %v1482
  %v1538 = vsel %vm923, %v1522, %v1484
  %v1539 = vsel %vm923, %v1523, %v1486
  %v1540 = vsel %vm923, %v1524, %v1488
  %v1541 = vsel %vm923, %v1525, %v1490
  %v1542 = vsel %vm923, %v1526, %v1492
  %v1543 = vsel %vm923, %v1527, %v1494
  %v1544 = vsel %vm923, %v1528, %v1496
  %v1545 = vpack.c.bf16 %v1530, %v1529
  %v1546 = vpack.c.bf16 %v1532, %v1531
  %v1547 = vpack.c.bf16 %v1534, %v1533
  %v1548 = vpack.c.bf16 %v1536, %v1535
  %v1549 = vpack.c.bf16 %v1538, %v1537
  %v1550 = vpack.c.bf16 %v1540, %v1539
  %v1551 = vpack.c.bf16 %v1542, %v1541
  %v1552 = vpack.c.bf16 %v1544, %v1543
  %v1553 = vld [vmem:[%s9] sm:$0xf]
  %v1554 = vld [vmem:[%s9 + $0x4] sm:$0xf]
  %v1555 = vld [vmem:[%s9 + $0x8] sm:$0xf]
  %v1556 = vld [vmem:[%s9 + $0xc] sm:$0xf]
  %v1557 = vld [vmem:[%s9 + $0x10] sm:$0xf]
  %v1558 = vld [vmem:[%s9 + $0x14] sm:$0xf]
  %v1559 = vld [vmem:[%s9 + $0x18] sm:$0xf]
  %v1560 = vld [vmem:[%s9 + $0x1c] sm:$0xf]
  %v1561 = vld [vmem:[%s9 + $0x20] sm:$0xf]
  %v1562 = vld [vmem:[%s9 + $0x24] sm:$0xf]
  %v1563 = vld [vmem:[%s9 + $0x28] sm:$0xf]
  %v1564 = vld [vmem:[%s9 + $0x2c] sm:$0xf]
  %v1577 = vunpack.c.l.b16 %v1553
  %v1578 = vunpack.c.l.b16 %v1554
  %v1579 = vunpack.c.l.b16 %v1555
  %v1580 = vunpack.c.l.b16 %v1556
  %v1581 = vunpack.c.l.b16 %v1557
  %v1582 = vunpack.c.l.b16 %v1558
  %v1583 = vunpack.c.l.b16 %v1559
  %v1584 = vunpack.c.l.b16 %v1560
  %v1585 = vunpack.c.l.b16 %v1561
  %v1586 = vunpack.c.l.b16 %v1562
  %v1587 = vunpack.c.l.b16 %v1563
  %v1588 = vunpack.c.l.b16 %v1564
  %v1589 = vpack.c.b16 %v1578, %v1577
  %v1590 = vpack.c.b16 %v1580, %v1579
  %v1591 = vpack.c.b16 %v1582, %v1581
  %v1592 = vpack.c.b16 %v1584, %v1583
  %v1593 = vpack.c.b16 %v1586, %v1585
  %v1594 = vpack.c.b16 %v1588, %v1587
  %v1602 = vsel %vm305, %v1545, 0
  %v1605 = vsel %vm305, %v1546, 0
  %v1608 = vsel %vm305, %v1547, 0
  %v1611 = vsel %vm305, %v1548, 0
  %v1614 = vsel %vm305, %v1549, 0
  %v1617 = vsel %vm305, %v1550, 0
  %v1620 = vsel %vm305, %v1551, 0
  %v1623 = vsel %vm305, %v1552, 0
  %1625 = vmatprep.subr.bf16.mxu0 0
  %1626 = vmatpush1.bf16.msra.mxu0 %v1589
  %1627 = vmatprep.subr.bf16.mxu0 0
  %1628 = vmatpush1.bf16.msra.mxu0 %v1590
  %1629 = vmatprep.subr.bf16.mxu0 0
  %1630 = vmatpush1.bf16.msra.mxu0 %v1591
  %1631 = vmatprep.subr.bf16.mxu0 0
  %1632 = vmatpush1.bf16.msra.mxu0 %v1592
  %1633 = vmatprep.subr.bf16.mxu0 0
  %1634 = vmatpush1.bf16.msra.mxu0 %v1593
  %1635 = vmatprep.subr.bf16.mxu0 0
  %1636 = vmatpush1.bf16.msra.mxu0 %v1594
  %1637 = vmatprep.subr.bf16.mxu0 0
  %1638 = vmatpush1.bf16.msra.mxu0 0
  %1639 = vmatprep.subr.bf16.mxu0 0
  %1640 = vmatpush1.bf16.msra.mxu0 0
  %1641 = vmatprep.subr.bf16.mxu0 0
  %1642 = vmatpush1.bf16.msra.mxu0 0
  %1643 = vmatprep.subr.bf16.mxu0 0
  %1644 = vmatpush1.bf16.msra.mxu0 0
  %1645 = vmatprep.subr.bf16.mxu0 0
  %1646 = vmatpush1.bf16.msra.mxu0 0
  %1647 = vmatprep.subr.bf16.mxu0 0
  %1648 = vmatpush1.bf16.msra.mxu0 0
  %1649 = vmatprep.subr.bf16.mxu0 0
  %1650 = vmatpush1.bf16.msra.mxu0 0
  %1651 = vmatprep.subr.bf16.mxu0 0
  %1652 = vmatpush1.bf16.msra.mxu0 0
  %1653 = vmatprep.subr.bf16.mxu0 0
  %1654 = vmatpush1.bf16.msra.mxu0 0
  %1655 = vmatprep.subr.bf16.mxu0 0
  %1656 = vmatpush1.bf16.msra.mxu0 0
  %1657 = vmatprep.mubr.bf16.mxu0 0
  %1658 = vmatmul.mubr.bf16.gmra.mrb[0].mxu0 %v1602
  %v1659 = vpop.f32.mrb[0].mxu0
  %v1660 = vadd.f32 0.0, %v1659
  %v1661 = vpop.f32.mrb[0].mxu0
  %v1662 = vpop.f32.mrb[0].mxu0
  %v1663 = vadd.f32 0.0, %v1662
  %v1664 = vpop.f32.mrb[0].mxu0
  %1665 = vmatprep.mubr.bf16.mxu0 0
  %1666 = vmatmul.mubr.bf16.gmra.mrb[0].mxu0 %v1605
  %v1667 = vpop.f32.mrb[0].mxu0
  %v1668 = vadd.f32 0.0, %v1667
  %v1669 = vpop.f32.mrb[0].mxu0
  %v1670 = vpop.f32.mrb[0].mxu0
  %v1671 = vadd.f32 0.0, %v1670
  %v1672 = vpop.f32.mrb[0].mxu0
  %1673 = vmatprep.mubr.bf16.mxu0 0
  %1674 = vmatmul.mubr.bf16.gmra.mrb[0].mxu0 %v1608
  %v1675 = vpop.f32.mrb[0].mxu0
  %v1676 = vadd.f32 0.0, %v1675
  %v1677 = vpop.f32.mrb[0].mxu0
  %v1678 = vpop.f32.mrb[0].mxu0
  %v1679 = vadd.f32 0.0, %v1678
  %v1680 = vpop.f32.mrb[0].mxu0
  %1681 = vmatprep.mubr.bf16.mxu0 0
  %1682 = vmatmul.mubr.bf16.gmra.mrb[0].mxu0 %v1611
  %v1683 = vpop.f32.mrb[0].mxu0
  %v1684 = vadd.f32 0.0, %v1683
  %v1685 = vpop.f32.mrb[0].mxu0
  %v1686 = vpop.f32.mrb[0].mxu0
  %v1687 = vadd.f32 0.0, %v1686
  %v1688 = vpop.f32.mrb[0].mxu0
  %1689 = vmatprep.mubr.bf16.mxu0 0
  %1690 = vmatmul.mubr.bf16.gmra.mrb[0].mxu0 %v1614
  %v1691 = vpop.f32.mrb[0].mxu0
  %v1692 = vadd.f32 0.0, %v1691
  %v1693 = vpop.f32.mrb[0].mxu0
  %v1694 = vpop.f32.mrb[0].mxu0
  %v1695 = vadd.f32 0.0, %v1694
  %v1696 = vpop.f32.mrb[0].mxu0
  %1697 = vmatprep.mubr.bf16.mxu0 0
  %1698 = vmatmul.mubr.bf16.gmra.mrb[0].mxu0 %v1617
  %v1699 = vpop.f32.mrb[0].mxu0
  %v1700 = vadd.f32 0.0, %v1699
  %v1701 = vpop.f32.mrb[0].mxu0
  %v1702 = vpop.f32.mrb[0].mxu0
  %v1703 = vadd.f32 0.0, %v1702
  %v1704 = vpop.f32.mrb[0].mxu0
  %1705 = vmatprep.mubr.bf16.mxu0 0
  %1706 = vmatmul.mubr.bf16.gmra.mrb[0].mxu0 %v1620
  %v1707 = vpop.f32.mrb[0].mxu0
  %v1708 = vadd.f32 0.0, %v1707
  %v1709 = vpop.f32.mrb[0].mxu0
  %v1710 = vpop.f32.mrb[0].mxu0
  %v1711 = vadd.f32 0.0, %v1710
  %v1712 = vpop.f32.mrb[0].mxu0
  %1713 = vmatprep.mubr.bf16.mxu0 0
  %1714 = vmatmul.mubr.bf16.gmra.mrb[0].mxu0 %v1623
  %v1715 = vpop.f32.mrb[0].mxu0
  %v1716 = vadd.f32 0.0, %v1715
  %v1717 = vpop.f32.mrb[0].mxu0
  %v1718 = vpop.f32.mrb[0].mxu0
  %v1719 = vadd.f32 0.0, %v1718
  %v1720 = vpop.f32.mrb[0].mxu0
  %1721 = vdwg.mxu0
  %vm1722 = vcmask 392192
  %v1723 = vsel %vm1722, %v1660, 0.0
  %v1724 = vsel %vm1722, %v1663, 0.0
  %v1725 = vadd.f32 %v1723, %v1724
  %v1726 = vsel %vm1722, %v1668, 0.0
  %v1727 = vadd.f32 %v1725, %v1726
  %v1728 = vsel %vm1722, %v1671, 0.0
  %v1729 = vadd.f32 %v1727, %v1728
  %v1730 = vsel %vm1722, %v1676, 0.0
  %v1731 = vadd.f32 %v1729, %v1730
  %v1732 = vsel %vm1722, %v1679, 0.0
  %v1733 = vadd.f32 %v1731, %v1732
  %v1734 = vsel %vm1722, %v1684, 0.0
  %v1735 = vadd.f32 %v1733, %v1734
  %v1736 = vsel %vm1722, %v1687, 0.0
  %v1737 = vadd.f32 %v1735, %v1736
  %v1738 = vsel %vm1722, %v1692, 0.0
  %v1739 = vadd.f32 %v1737, %v1738
  %v1740 = vsel %vm1722, %v1695, 0.0
  %v1741 = vadd.f32 %v1739, %v1740
  %v1742 = vsel %vm1722, %v1700, 0.0
  %v1743 = vadd.f32 %v1741, %v1742
  %v1744 = vsel %vm1722, %v1703, 0.0
  %v1745 = vadd.f32 %v1743, %v1744
  %v1746 = vsel %vm1722, %v1708, 0.0
  %v1747 = vadd.f32 %v1745, %v1746
  %v1748 = vsel %vm1722, %v1711, 0.0
  %v1749 = vadd.f32 %v1747, %v1748
  %v1750 = vsel %vm1722, %v1716, 0.0
  %v1751 = vadd.f32 %v1749, %v1750
  %v1752 = vsel %vm1722, %v1719, 0.0
  %v1753 = vadd.f32 %v1751, %v1752
  %v1754 = vrot.slane %v1753, 4
  %v1755 = vadd.f32 %v1753, %v1754
  %v1756 = vrot.slane %v1755, 2
  %v1757 = vadd.f32 %v1755, %v1756
  %v1758 = vrot.slane %v1757, 1
  %v1759 = vadd.f32 %v1757, %v1758
  %v1760 = vmul.f32 %v1759, %v343
  %v1761 = vsub.f32 %v1660, %v1760
  %v1762 = vsub.f32 %v1663, %v1760
  %v1763 = vsub.f32 %v1668, %v1760
  %v1764 = vsub.f32 %v1671, %v1760
  %v1765 = vsub.f32 %v1676, %v1760
  %v1766 = vsub.f32 %v1679, %v1760
  %v1767 = vsub.f32 %v1684, %v1760
  %v1768 = vsub.f32 %v1687, %v1760
  %v1769 = vsub.f32 %v1692, %v1760
  %v1770 = vsub.f32 %v1695, %v1760
  %v1771 = vsub.f32 %v1700, %v1760
  %v1772 = vsub.f32 %v1703, %v1760
  %v1773 = vsub.f32 %v1708, %v1760
  %v1774 = vsub.f32 %v1711, %v1760
  %v1775 = vsub.f32 %v1716, %v1760
  %v1776 = vsub.f32 %v1719, %v1760
  %v1777 = vmul.f32 %v1761, %v1761
  %v1778 = vmul.f32 %v1762, %v1762
  %v1779 = vmul.f32 %v1763, %v1763
  %v1780 = vmul.f32 %v1764, %v1764
  %v1781 = vmul.f32 %v1765, %v1765
  %v1782 = vmul.f32 %v1766, %v1766
  %v1783 = vmul.f32 %v1767, %v1767
  %v1784 = vmul.f32 %v1768, %v1768
  %v1785 = vmul.f32 %v1769, %v1769
  %v1786 = vmul.f32 %v1770, %v1770
  %v1787 = vmul.f32 %v1771, %v1771
  %v1788 = vmul.f32 %v1772, %v1772
  %v1789 = vmul.f32 %v1773, %v1773
  %v1790 = vmul.f32 %v1774, %v1774
  %v1791 = vmul.f32 %v1775, %v1775
  %v1792 = vmul.f32 %v1776, %v1776
  %v1793 = vsel %vm1722, %v1777, 0.0
  %v1794 = vsel %vm1722, %v1778, 0.0
  %v1795 = vadd.f32 %v1793, %v1794
  %v1796 = vsel %vm1722, %v1779, 0.0
  %v1797 = vadd.f32 %v1795, %v1796
  %v1798 = vsel %vm1722, %v1780, 0.0
  %v1799 = vadd.f32 %v1797, %v1798
  %v1800 = vsel %vm1722, %v1781, 0.0
  %v1801 = vadd.f32 %v1799, %v1800
  %v1802 = vsel %vm1722, %v1782, 0.0
  %v1803 = vadd.f32 %v1801, %v1802
  %v1804 = vsel %vm1722, %v1783, 0.0
  %v1805 = vadd.f32 %v1803, %v1804
  %v1806 = vsel %vm1722, %v1784, 0.0
  %v1807 = vadd.f32 %v1805, %v1806
  %v1808 = vsel %vm1722, %v1785, 0.0
  %v1809 = vadd.f32 %v1807, %v1808
  %v1810 = vsel %vm1722, %v1786, 0.0
  %v1811 = vadd.f32 %v1809, %v1810
  %v1812 = vsel %vm1722, %v1787, 0.0
  %v1813 = vadd.f32 %v1811, %v1812
  %v1814 = vsel %vm1722, %v1788, 0.0
  %v1815 = vadd.f32 %v1813, %v1814
  %v1816 = vsel %vm1722, %v1789, 0.0
  %v1817 = vadd.f32 %v1815, %v1816
  %v1818 = vsel %vm1722, %v1790, 0.0
  %v1819 = vadd.f32 %v1817, %v1818
  %v1820 = vsel %vm1722, %v1791, 0.0
  %v1821 = vadd.f32 %v1819, %v1820
  %v1822 = vsel %vm1722, %v1792, 0.0
  %v1823 = vadd.f32 %v1821, %v1822
  %v1824 = vrot.slane %v1823, 4
  %v1825 = vadd.f32 %v1823, %v1824
  %v1826 = vrot.slane %v1825, 2
  %v1827 = vadd.f32 %v1825, %v1826
  %v1828 = vrot.slane %v1827, 1
  %v1829 = vadd.f32 %v1827, %v1828
  %v1830 = vmul.f32 %v1829, %v343
  %v1831 = vadd.f32 %v1830, 1e-05
  %v1832 = vrsqrt.pop %v1831
  %v1833 = vmul.f32 %v1761, %v1832
  %v1834 = vmul.f32 %v1762, %v1832
  %v1835 = vmul.f32 %v1763, %v1832
  %v1836 = vmul.f32 %v1764, %v1832
  %v1837 = vmul.f32 %v1765, %v1832
  %v1838 = vmul.f32 %v1766, %v1832
  %v1839 = vmul.f32 %v1767, %v1832
  %v1840 = vmul.f32 %v1768, %v1832
  %v1841 = vmul.f32 %v1769, %v1832
  %v1842 = vmul.f32 %v1770, %v1832
  %v1843 = vmul.f32 %v1771, %v1832
  %v1844 = vmul.f32 %v1772, %v1832
  %v1845 = vmul.f32 %v1773, %v1832
  %v1846 = vmul.f32 %v1774, %v1832
  %v1847 = vmul.f32 %v1775, %v1832
  %v1848 = vmul.f32 %v1776, %v1832
  %v1849 = vld [vmem:[%s10] sm:$0x1]
  %v1851 = vlaneseq
  %v1852 = vshrl.u32 %v1851, 7
  %v1853 = vsub.s32 0, %v1852
  %v1854 = vrot.slane %v1849, %v1853
  %v1856 = vmul.f32 %v1833, %v1854
  %v1857 = vmul.f32 %v1834, %v1854
  %v1858 = vmul.f32 %v1835, %v1854
  %v1859 = vmul.f32 %v1836, %v1854
  %v1860 = vmul.f32 %v1837, %v1854
  %v1861 = vmul.f32 %v1838, %v1854
  %v1862 = vmul.f32 %v1839, %v1854
  %v1863 = vmul.f32 %v1840, %v1854
  %v1864 = vmul.f32 %v1841, %v1854
  %v1865 = vmul.f32 %v1842, %v1854
  %v1866 = vmul.f32 %v1843, %v1854
  %v1867 = vmul.f32 %v1844, %v1854
  %v1868 = vmul.f32 %v1845, %v1854
  %v1869 = vmul.f32 %v1846, %v1854
  %v1870 = vmul.f32 %v1847, %v1854
  %v1871 = vmul.f32 %v1848, %v1854
  %v1872 = vld [vmem:[%s11] sm:$0x1]
  %v1874 = vlaneseq
  %v1875 = vshrl.u32 %v1874, 7
  %v1876 = vsub.s32 0, %v1875
  %v1877 = vrot.slane %v1872, %v1876
  %v1879 = vadd.f32 %v1856, %v1877
  %v1880 = vadd.f32 %v1857, %v1877
  %v1881 = vadd.f32 %v1858, %v1877
  %v1882 = vadd.f32 %v1859, %v1877
  %v1883 = vadd.f32 %v1860, %v1877
  %v1884 = vadd.f32 %v1861, %v1877
  %v1885 = vadd.f32 %v1862, %v1877
  %v1886 = vadd.f32 %v1863, %v1877
  %v1887 = vadd.f32 %v1864, %v1877
  %v1888 = vadd.f32 %v1865, %v1877
  %v1889 = vadd.f32 %v1866, %v1877
  %v1890 = vadd.f32 %v1867, %v1877
  %v1891 = vadd.f32 %v1868, %v1877
  %v1892 = vadd.f32 %v1869, %v1877
  %v1893 = vadd.f32 %v1870, %v1877
  %v1894 = vadd.f32 %v1871, %v1877
  %v1895 = vmax.f32 %v1879, 0.0
  %v1896 = vmax.f32 %v1880, 0.0
  %v1897 = vmax.f32 %v1881, 0.0
  %v1898 = vmax.f32 %v1882, 0.0
  %v1899 = vmax.f32 %v1883, 0.0
  %v1900 = vmax.f32 %v1884, 0.0
  %v1901 = vmax.f32 %v1885, 0.0
  %v1902 = vmax.f32 %v1886, 0.0
  %v1903 = vmax.f32 %v1887, 0.0
  %v1904 = vmax.f32 %v1888, 0.0
  %v1905 = vmax.f32 %v1889, 0.0
  %v1906 = vmax.f32 %v1890, 0.0
  %v1907 = vmax.f32 %v1891, 0.0
  %v1908 = vmax.f32 %v1892, 0.0
  %v1909 = vmax.f32 %v1893, 0.0
  %v1910 = vmax.f32 %v1894, 0.0
  %v1911 = vrot.slane %v1895, 7
  %v1912 = vrot.slane %v1896, 7
  %v1913 = vrot.slane %v1897, 7
  %v1914 = vrot.slane %v1898, 7
  %v1915 = vrot.slane %v1899, 7
  %v1916 = vrot.slane %v1900, 7
  %v1917 = vrot.slane %v1901, 7
  %v1918 = vrot.slane %v1902, 7
  %v1919 = vrot.slane %v1903, 7
  %v1920 = vrot.slane %v1904, 7
  %v1921 = vrot.slane %v1905, 7
  %v1922 = vrot.slane %v1906, 7
  %v1923 = vrot.slane %v1907, 7
  %v1924 = vrot.slane %v1908, 7
  %v1925 = vrot.slane %v1909, 7
  %v1926 = vrot.slane %v1910, 7
  %v1927 = vsel %vm600, %v1925, %v1926
  %v1928 = vsel %vm600, %v1924, %v1925
  %v1929 = vsel %vm600, %v1923, %v1924
  %v1930 = vsel %vm600, %v1922, %v1923
  %v1931 = vsel %vm600, %v1921, %v1922
  %v1932 = vsel %vm600, %v1920, %v1921
  %v1933 = vsel %vm600, %v1919, %v1920
  %v1934 = vsel %vm600, %v1918, %v1919
  %v1935 = vsel %vm600, %v1917, %v1918
  %v1936 = vsel %vm600, %v1916, %v1917
  %v1937 = vsel %vm600, %v1915, %v1916
  %v1938 = vsel %vm600, %v1914, %v1915
  %v1939 = vsel %vm600, %v1913, %v1914
  %v1940 = vsel %vm600, %v1912, %v1913
  %v1941 = vsel %vm600, %v1911, %v1912
  %v1942 = vsel %vm600, %v1926, %v1911
  %v1943 = vmul.f32 %v1942, %v620
  %v1944 = vmul.f32 %v1941, %v625
  %v1945 = vmul.f32 %v1940, %v630
  %v1946 = vmul.f32 %v1939, %v635
  %v1947 = vmul.f32 %v1938, %v640
  %v1948 = vmul.f32 %v1937, %v645
  %v1949 = vmul.f32 %v1936, %v650
  %v1950 = vmul.f32 %v1935, %v655
  %v1951 = vmul.f32 %v1934, %v660
  %v1952 = vmul.f32 %v1933, %v665
  %v1953 = vmul.f32 %v1932, %v670
  %v1954 = vmul.f32 %v1931, %v675
  %v1955 = vmul.f32 %v1930, %v680
  %v1956 = vmul.f32 %v1929, %v685
  %v1957 = vmul.f32 %v1928, %v690
  %v1958 = vmul.f32 %v1927, %v695
  %v1959 = vrot.slane %v1895, 1
  %v1960 = vrot.slane %v1896, 1
  %v1961 = vrot.slane %v1897, 1
  %v1962 = vrot.slane %v1898, 1
  %v1963 = vrot.slane %v1899, 1
  %v1964 = vrot.slane %v1900, 1
  %v1965 = vrot.slane %v1901, 1
  %v1966 = vrot.slane %v1902, 1
  %v1967 = vrot.slane %v1903, 1
  %v1968 = vrot.slane %v1904, 1
  %v1969 = vrot.slane %v1905, 1
  %v1970 = vrot.slane %v1906, 1
  %v1971 = vrot.slane %v1907, 1
  %v1972 = vrot.slane %v1908, 1
  %v1973 = vrot.slane %v1909, 1
  %v1974 = vrot.slane %v1910, 1
  %v1975 = vsel %vm729, %v1973, %v1974
  %v1976 = vsel %vm729, %v1972, %v1973
  %v1977 = vsel %vm729, %v1971, %v1972
  %v1978 = vsel %vm729, %v1970, %v1971
  %v1979 = vsel %vm729, %v1969, %v1970
  %v1980 = vsel %vm729, %v1968, %v1969
  %v1981 = vsel %vm729, %v1967, %v1968
  %v1982 = vsel %vm729, %v1966, %v1967
  %v1983 = vsel %vm729, %v1965, %v1966
  %v1984 = vsel %vm729, %v1964, %v1965
  %v1985 = vsel %vm729, %v1963, %v1964
  %v1986 = vsel %vm729, %v1962, %v1963
  %v1987 = vsel %vm729, %v1961, %v1962
  %v1988 = vsel %vm729, %v1960, %v1961
  %v1989 = vsel %vm729, %v1959, %v1960
  %v1990 = vsel %vm729, %v1974, %v1959
  %v1991 = vmul.f32 %v1989, %v749
  %v1992 = vmul.f32 %v1988, %v754
  %v1993 = vmul.f32 %v1987, %v759
  %v1994 = vmul.f32 %v1986, %v764
  %v1995 = vmul.f32 %v1985, %v769
  %v1996 = vmul.f32 %v1984, %v774
  %v1997 = vmul.f32 %v1983, %v779
  %v1998 = vmul.f32 %v1982, %v784
  %v1999 = vmul.f32 %v1981, %v789
  %v2000 = vmul.f32 %v1980, %v794
  %v2001 = vmul.f32 %v1979, %v799
  %v2002 = vmul.f32 %v1978, %v804
  %v2003 = vmul.f32 %v1977, %v809
  %v2004 = vmul.f32 %v1976, %v814
  %v2005 = vmul.f32 %v1975, %v819
  %v2006 = vmul.f32 %v1990, %v824
  %2023 = vrot.lane.b32.xlu0 %v1895, 48
  %v2024 = vpop.permute.xlu0 %2023
  %2025 = vrot.lane.b32.xlu0 %v1896, 48
  %v2026 = vpop.permute.xlu0 %2025
  %2027 = vrot.lane.b32.xlu0 %v1897, 48
  %v2028 = vpop.permute.xlu0 %2027
  %2029 = vrot.lane.b32.xlu0 %v1898, 48
  %v2030 = vpop.permute.xlu0 %2029
  %2031 = vrot.lane.b32.xlu0 %v1899, 48
  %v2032 = vpop.permute.xlu0 %2031
  %2033 = vrot.lane.b32.xlu0 %v1900, 48
  %v2034 = vpop.permute.xlu0 %2033
  %2035 = vrot.lane.b32.xlu0 %v1901, 48
  %v2036 = vpop.permute.xlu0 %2035
  %2037 = vrot.lane.b32.xlu0 %v1902, 48
  %v2038 = vpop.permute.xlu0 %2037
  %2039 = vrot.lane.b32.xlu0 %v1903, 48
  %v2040 = vpop.permute.xlu0 %2039
  %2041 = vrot.lane.b32.xlu0 %v1904, 48
  %v2042 = vpop.permute.xlu0 %2041
  %2043 = vrot.lane.b32.xlu0 %v1905, 48
  %v2044 = vpop.permute.xlu0 %2043
  %2045 = vrot.lane.b32.xlu0 %v1906, 48
  %v2046 = vpop.permute.xlu0 %2045
  %2047 = vrot.lane.b32.xlu0 %v1907, 48
  %v2048 = vpop.permute.xlu0 %2047
  %2049 = vrot.lane.b32.xlu0 %v1908, 48
  %v2050 = vpop.permute.xlu0 %2049
  %2051 = vrot.lane.b32.xlu0 %v1909, 48
  %v2052 = vpop.permute.xlu0 %2051
  %2053 = vrot.lane.b32.xlu0 %v1910, 48
  %v2054 = vpop.permute.xlu0 %2053
  %2087 = vrot.lane.b32.xlu0 %v1991, 96
  %v2088 = vpop.permute.xlu0 %2087
  %2089 = vrot.lane.b32.xlu0 %v1992, 96
  %v2090 = vpop.permute.xlu0 %2089
  %2091 = vrot.lane.b32.xlu0 %v1993, 96
  %v2092 = vpop.permute.xlu0 %2091
  %2093 = vrot.lane.b32.xlu0 %v1994, 96
  %v2094 = vpop.permute.xlu0 %2093
  %2095 = vrot.lane.b32.xlu0 %v1995, 96
  %v2096 = vpop.permute.xlu0 %2095
  %2097 = vrot.lane.b32.xlu0 %v1996, 96
  %v2098 = vpop.permute.xlu0 %2097
  %2099 = vrot.lane.b32.xlu0 %v1997, 96
  %v2100 = vpop.permute.xlu0 %2099
  %2101 = vrot.lane.b32.xlu0 %v1998, 96
  %v2102 = vpop.permute.xlu0 %2101
  %2103 = vrot.lane.b32.xlu0 %v1999, 96
  %v2104 = vpop.permute.xlu0 %2103
  %2105 = vrot.lane.b32.xlu0 %v2000, 96
  %v2106 = vpop.permute.xlu0 %2105
  %2107 = vrot.lane.b32.xlu0 %v2001, 96
  %v2108 = vpop.permute.xlu0 %2107
  %2109 = vrot.lane.b32.xlu0 %v2002, 96
  %v2110 = vpop.permute.xlu0 %2109
  %2111 = vrot.lane.b32.xlu0 %v2003, 96
  %v2112 = vpop.permute.xlu0 %2111
  %2113 = vrot.lane.b32.xlu0 %v2004, 96
  %v2114 = vpop.permute.xlu0 %2113
  %2115 = vrot.lane.b32.xlu0 %v2005, 96
  %v2116 = vpop.permute.xlu0 %2115
  %2117 = vrot.lane.b32.xlu0 %v2006, 96
  %v2118 = vpop.permute.xlu0 %2117
  %v2135 = vsel %vm1722, %v1943, %v2024
  %v2136 = vsel %vm1722, %v1944, %v2026
  %v2137 = vsel %vm1722, %v1945, %v2028
  %v2138 = vsel %vm1722, %v1946, %v2030
  %v2139 = vsel %vm1722, %v1947, %v2032
  %v2140 = vsel %vm1722, %v1948, %v2034
  %v2141 = vsel %vm1722, %v1949, %v2036
  %v2142 = vsel %vm1722, %v1950, %v2038
  %v2143 = vsel %vm1722, %v1951, %v2040
  %v2144 = vsel %vm1722, %v1952, %v2042
  %v2145 = vsel %vm1722, %v1953, %v2044
  %v2146 = vsel %vm1722, %v1954, %v2046
  %v2147 = vsel %vm1722, %v1955, %v2048
  %v2148 = vsel %vm1722, %v1956, %v2050
  %v2149 = vsel %vm1722, %v1957, %v2052
  %v2150 = vsel %vm1722, %v1958, %v2054
  %v2151 = vsel %vm305, %v2135, %v2088
  %v2152 = vsel %vm305, %v2136, %v2090
  %v2153 = vsel %vm305, %v2137, %v2092
  %v2154 = vsel %vm305, %v2138, %v2094
  %v2155 = vsel %vm305, %v2139, %v2096
  %v2156 = vsel %vm305, %v2140, %v2098
  %v2157 = vsel %vm305, %v2141, %v2100
  %v2158 = vsel %vm305, %v2142, %v2102
  %v2159 = vsel %vm305, %v2143, %v2104
  %v2160 = vsel %vm305, %v2144, %v2106
  %v2161 = vsel %vm305, %v2145, %v2108
  %v2162 = vsel %vm305, %v2146, %v2110
  %v2163 = vsel %vm305, %v2147, %v2112
  %v2164 = vsel %vm305, %v2148, %v2114
  %v2165 = vsel %vm305, %v2149, %v2116
  %v2166 = vsel %vm305, %v2150, %v2118
  %v2167 = vpack.c.bf16 %v2152, %v2151
  %v2168 = vpack.c.bf16 %v2090, %v2088
  %v2169 = vpack.c.bf16 %v2154, %v2153
  %v2170 = vpack.c.bf16 %v2094, %v2092
  %v2171 = vpack.c.bf16 %v2156, %v2155
  %v2172 = vpack.c.bf16 %v2098, %v2096
  %v2173 = vpack.c.bf16 %v2158, %v2157
  %v2174 = vpack.c.bf16 %v2102, %v2100
  %v2175 = vpack.c.bf16 %v2160, %v2159
  %v2176 = vpack.c.bf16 %v2106, %v2104
  %v2177 = vpack.c.bf16 %v2162, %v2161
  %v2178 = vpack.c.bf16 %v2110, %v2108
  %v2179 = vpack.c.bf16 %v2164, %v2163
  %v2180 = vpack.c.bf16 %v2114, %v2112
  %v2181 = vpack.c.bf16 %v2166, %v2165
  %v2182 = vpack.c.bf16 %v2118, %v2116
  %v2183 = vld [vmem:[%s12] sm:$0xf]
  %v2184 = vld [vmem:[%s12 + $0x4] sm:$0xf]
  %v2185 = vld [vmem:[%s12 + $0x8] sm:$0xf]
  %v2186 = vld [vmem:[%s12 + $0xc] sm:$0xf]
  %v2187 = vld [vmem:[%s12 + $0x10] sm:$0xf]
  %v2188 = vld [vmem:[%s12 + $0x14] sm:$0xf]
  %v2189 = vld [vmem:[%s12 + $0x18] sm:$0xf]
  %v2190 = vld [vmem:[%s12 + $0x1c] sm:$0xf]
  %v2191 = vld [vmem:[%s12 + $0x20] sm:$0xf]
  %v2192 = vld [vmem:[%s12 + $0x24] sm:$0xf]
  %v2193 = vld [vmem:[%s12 + $0x28] sm:$0xf]
  %v2194 = vld [vmem:[%s12 + $0x2c] sm:$0xf]
  %v2195 = vld [vmem:[%s12 + $0x30] sm:$0xf]
  %v2196 = vld [vmem:[%s12 + $0x34] sm:$0xf]
  %v2197 = vld [vmem:[%s12 + $0x38] sm:$0xf]
  %v2198 = vld [vmem:[%s12 + $0x3c] sm:$0xf]
  %v2199 = vld [vmem:[%s12 + $0x40] sm:$0xf]
  %v2200 = vld [vmem:[%s12 + $0x44] sm:$0xf]
  %v2219 = vunpack.c.l.b16 %v2183
  %v2220 = vunpack.c.l.b16 %v2184
  %v2221 = vunpack.c.l.b16 %v2185
  %v2222 = vunpack.c.l.b16 %v2186
  %v2223 = vunpack.c.l.b16 %v2187
  %v2224 = vunpack.c.l.b16 %v2188
  %v2225 = vunpack.c.l.b16 %v2189
  %v2226 = vunpack.c.l.b16 %v2190
  %v2227 = vunpack.c.l.b16 %v2191
  %v2228 = vunpack.c.l.b16 %v2192
  %v2229 = vunpack.c.l.b16 %v2193
  %v2230 = vunpack.c.l.b16 %v2194
  %v2231 = vunpack.c.l.b16 %v2195
  %v2232 = vunpack.c.l.b16 %v2196
  %v2233 = vunpack.c.l.b16 %v2197
  %v2234 = vunpack.c.l.b16 %v2198
  %v2235 = vunpack.c.l.b16 %v2199
  %v2236 = vunpack.c.l.b16 %v2200
  %v2237 = vpack.c.b16 %v2220, %v2219
  %v2238 = vpack.c.b16 %v2222, %v2221
  %v2239 = vpack.c.b16 %v2224, %v2223
  %v2240 = vpack.c.b16 %v2226, %v2225
  %v2241 = vpack.c.b16 %v2228, %v2227
  %v2242 = vpack.c.b16 %v2230, %v2229
  %v2243 = vpack.c.b16 %v2232, %v2231
  %v2244 = vpack.c.b16 %v2234, %v2233
  %v2245 = vpack.c.b16 %v2236, %v2235
  %vm2255 = vcmask 130048
  %v2257 = vsel %vm2255, %v2168, 0
  %v2260 = vsel %vm2255, %v2170, 0
  %v2263 = vsel %vm2255, %v2172, 0
  %v2266 = vsel %vm2255, %v2174, 0
  %v2269 = vsel %vm2255, %v2176, 0
  %v2272 = vsel %vm2255, %v2178, 0
  %v2275 = vsel %vm2255, %v2180, 0
  %v2278 = vsel %vm2255, %v2182, 0
  %2280 = vmatprep.subr.bf16.mxu0 0
  %2281 = vmatpush1.bf16.msra.mxu0 %v2237
  %2282 = vmatprep.subr.bf16.mxu0 0
  %2283 = vmatpush1.bf16.msra.mxu0 %v2238
  %2284 = vmatprep.subr.bf16.mxu0 0
  %2285 = vmatpush1.bf16.msra.mxu0 %v2239
  %2286 = vmatprep.subr.bf16.mxu0 0
  %2287 = vmatpush1.bf16.msra.mxu0 %v2240
  %2288 = vmatprep.subr.bf16.mxu0 0
  %2289 = vmatpush1.bf16.msra.mxu0 %v2241
  %2290 = vmatprep.subr.bf16.mxu0 0
  %2291 = vmatpush1.bf16.msra.mxu0 %v2242
  %2292 = vmatprep.subr.bf16.mxu0 0
  %2293 = vmatpush1.bf16.msra.mxu0 %v2243
  %2294 = vmatprep.subr.bf16.mxu0 0
  %2295 = vmatpush1.bf16.msra.mxu0 %v2244
  %2296 = vmatprep.subr.bf16.mxu0 0
  %2297 = vmatpush1.bf16.msra.mxu0 %v2245
  %2298 = vmatprep.subr.bf16.mxu0 0
  %2299 = vmatpush1.bf16.msra.mxu0 0
  %2300 = vmatprep.subr.bf16.mxu0 0
  %2301 = vmatpush1.bf16.msra.mxu0 0
  %2302 = vmatprep.subr.bf16.mxu0 0
  %2303 = vmatpush1.bf16.msra.mxu0 0
  %2304 = vmatprep.subr.bf16.mxu0 0
  %2305 = vmatpush1.bf16.msra.mxu0 0
  %2306 = vmatprep.subr.bf16.mxu0 0
  %2307 = vmatpush1.bf16.msra.mxu0 0
  %2308 = vmatprep.subr.bf16.mxu0 0
  %2309 = vmatpush1.bf16.msra.mxu0 0
  %2310 = vmatprep.subr.bf16.mxu0 0
  %2311 = vmatpush1.bf16.msra.mxu0 0
  %2312 = vmatprep.mubr.bf16.mxu0 %v2257
  %2313 = vmatmul.mubr.bf16.gmra.mrb[0].mxu0 %v2167
  %v2314 = vpop.f32.mrb[0].mxu0
  %v2315 = vadd.f32 0.0, %v2314
  %v2316 = vpop.f32.mrb[0].mxu0
  %v2317 = vpop.f32.mrb[0].mxu0
  %v2318 = vadd.f32 0.0, %v2317
  %v2319 = vpop.f32.mrb[0].mxu0
  %2320 = vmatprep.mubr.bf16.mxu0 %v2260
  %2321 = vmatmul.mubr.bf16.gmra.mrb[0].mxu0 %v2169
  %v2322 = vpop.f32.mrb[0].mxu0
  %v2323 = vadd.f32 0.0, %v2322
  %v2324 = vpop.f32.mrb[0].mxu0
  %v2325 = vpop.f32.mrb[0].mxu0
  %v2326 = vadd.f32 0.0, %v2325
  %v2327 = vpop.f32.mrb[0].mxu0
  %2328 = vmatprep.mubr.bf16.mxu0 %v2263
  %2329 = vmatmul.mubr.bf16.gmra.mrb[0].mxu0 %v2171
  %v2330 = vpop.f32.mrb[0].mxu0
  %v2331 = vadd.f32 0.0, %v2330
  %v2332 = vpop.f32.mrb[0].mxu0
  %v2333 = vpop.f32.mrb[0].mxu0
  %v2334 = vadd.f32 0.0, %v2333
  %v2335 = vpop.f32.mrb[0].mxu0
  %2336 = vmatprep.mubr.bf16.mxu0 %v2266
  %2337 = vmatmul.mubr.bf16.gmra.mrb[0].mxu0 %v2173
  %v2338 = vpop.f32.mrb[0].mxu0
  %v2339 = vadd.f32 0.0, %v2338
  %v2340 = vpop.f32.mrb[0].mxu0
  %v2341 = vpop.f32.mrb[0].mxu0
  %v2342 = vadd.f32 0.0, %v2341
  %v2343 = vpop.f32.mrb[0].mxu0
  %2344 = vmatprep.mubr.bf16.mxu0 %v2269
  %2345 = vmatmul.mubr.bf16.gmra.mrb[0].mxu0 %v2175
  %v2346 = vpop.f32.mrb[0].mxu0
  %v2347 = vadd.f32 0.0, %v2346
  %v2348 = vpop.f32.mrb[0].mxu0
  %v2349 = vpop.f32.mrb[0].mxu0
  %v2350 = vadd.f32 0.0, %v2349
  %v2351 = vpop.f32.mrb[0].mxu0
  %2352 = vmatprep.mubr.bf16.mxu0 %v2272
  %2353 = vmatmul.mubr.bf16.gmra.mrb[0].mxu0 %v2177
  %v2354 = vpop.f32.mrb[0].mxu0
  %v2355 = vadd.f32 0.0, %v2354
  %v2356 = vpop.f32.mrb[0].mxu0
  %v2357 = vpop.f32.mrb[0].mxu0
  %v2358 = vadd.f32 0.0, %v2357
  %v2359 = vpop.f32.mrb[0].mxu0
  %2360 = vmatprep.mubr.bf16.mxu0 %v2275
  %2361 = vmatmul.mubr.bf16.gmra.mrb[0].mxu0 %v2179
  %v2362 = vpop.f32.mrb[0].mxu0
  %v2363 = vadd.f32 0.0, %v2362
  %v2364 = vpop.f32.mrb[0].mxu0
  %v2365 = vpop.f32.mrb[0].mxu0
  %v2366 = vadd.f32 0.0, %v2365
  %v2367 = vpop.f32.mrb[0].mxu0
  %2368 = vmatprep.mubr.bf16.mxu0 %v2278
  %2369 = vmatmul.mubr.bf16.gmra.mrb[0].mxu0 %v2181
  %v2370 = vpop.f32.mrb[0].mxu0
  %v2371 = vadd.f32 0.0, %v2370
  %v2372 = vpop.f32.mrb[0].mxu0
  %v2373 = vpop.f32.mrb[0].mxu0
  %v2374 = vadd.f32 0.0, %v2373
  %v2375 = vpop.f32.mrb[0].mxu0
  %2376 = vdwg.mxu0
  %v2377 = vsel %vm923, %v2315, 0.0
  %v2378 = vsel %vm923, %v2318, 0.0
  %v2379 = vadd.f32 %v2377, %v2378
  %v2380 = vsel %vm923, %v2323, 0.0
  %v2381 = vadd.f32 %v2379, %v2380
  %v2382 = vsel %vm923, %v2326, 0.0
  %v2383 = vadd.f32 %v2381, %v2382
  %v2384 = vsel %vm923, %v2331, 0.0
  %v2385 = vadd.f32 %v2383, %v2384
  %v2386 = vsel %vm923, %v2334, 0.0
  %v2387 = vadd.f32 %v2385, %v2386
  %v2388 = vsel %vm923, %v2339, 0.0
  %v2389 = vadd.f32 %v2387, %v2388
  %v2390 = vsel %vm923, %v2342, 0.0
  %v2391 = vadd.f32 %v2389, %v2390
  %v2392 = vsel %vm923, %v2347, 0.0
  %v2393 = vadd.f32 %v2391, %v2392
  %v2394 = vsel %vm923, %v2350, 0.0
  %v2395 = vadd.f32 %v2393, %v2394
  %v2396 = vsel %vm923, %v2355, 0.0
  %v2397 = vadd.f32 %v2395, %v2396
  %v2398 = vsel %vm923, %v2358, 0.0
  %v2399 = vadd.f32 %v2397, %v2398
  %v2400 = vsel %vm923, %v2363, 0.0
  %v2401 = vadd.f32 %v2399, %v2400
  %v2402 = vsel %vm923, %v2366, 0.0
  %v2403 = vadd.f32 %v2401, %v2402
  %v2404 = vsel %vm923, %v2371, 0.0
  %v2405 = vadd.f32 %v2403, %v2404
  %v2406 = vsel %vm923, %v2374, 0.0
  %v2407 = vadd.f32 %v2405, %v2406
  %v2408 = vrot.slane %v2407, 4
  %v2409 = vadd.f32 %v2407, %v2408
  %v2410 = vrot.slane %v2409, 2
  %v2411 = vadd.f32 %v2409, %v2410
  %v2412 = vrot.slane %v2411, 1
  %v2413 = vadd.f32 %v2411, %v2412
  %v2414 = vmul.f32 %v2413, %v343
  %v2415 = vsub.f32 %v2315, %v2414
  %v2416 = vsub.f32 %v2318, %v2414
  %v2417 = vsub.f32 %v2323, %v2414
  %v2418 = vsub.f32 %v2326, %v2414
  %v2419 = vsub.f32 %v2331, %v2414
  %v2420 = vsub.f32 %v2334, %v2414
  %v2421 = vsub.f32 %v2339, %v2414
  %v2422 = vsub.f32 %v2342, %v2414
  %v2423 = vsub.f32 %v2347, %v2414
  %v2424 = vsub.f32 %v2350, %v2414
  %v2425 = vsub.f32 %v2355, %v2414
  %v2426 = vsub.f32 %v2358, %v2414
  %v2427 = vsub.f32 %v2363, %v2414
  %v2428 = vsub.f32 %v2366, %v2414
  %v2429 = vsub.f32 %v2371, %v2414
  %v2430 = vsub.f32 %v2374, %v2414
  %v2431 = vmul.f32 %v2415, %v2415
  %v2432 = vmul.f32 %v2416, %v2416
  %v2433 = vmul.f32 %v2417, %v2417
  %v2434 = vmul.f32 %v2418, %v2418
  %v2435 = vmul.f32 %v2419, %v2419
  %v2436 = vmul.f32 %v2420, %v2420
  %v2437 = vmul.f32 %v2421, %v2421
  %v2438 = vmul.f32 %v2422, %v2422
  %v2439 = vmul.f32 %v2423, %v2423
  %v2440 = vmul.f32 %v2424, %v2424
  %v2441 = vmul.f32 %v2425, %v2425
  %v2442 = vmul.f32 %v2426, %v2426
  %v2443 = vmul.f32 %v2427, %v2427
  %v2444 = vmul.f32 %v2428, %v2428
  %v2445 = vmul.f32 %v2429, %v2429
  %v2446 = vmul.f32 %v2430, %v2430
  %v2447 = vsel %vm923, %v2431, 0.0
  %v2448 = vsel %vm923, %v2432, 0.0
  %v2449 = vadd.f32 %v2447, %v2448
  %v2450 = vsel %vm923, %v2433, 0.0
  %v2451 = vadd.f32 %v2449, %v2450
  %v2452 = vsel %vm923, %v2434, 0.0
  %v2453 = vadd.f32 %v2451, %v2452
  %v2454 = vsel %vm923, %v2435, 0.0
  %v2455 = vadd.f32 %v2453, %v2454
  %v2456 = vsel %vm923, %v2436, 0.0
  %v2457 = vadd.f32 %v2455, %v2456
  %v2458 = vsel %vm923, %v2437, 0.0
  %v2459 = vadd.f32 %v2457, %v2458
  %v2460 = vsel %vm923, %v2438, 0.0
  %v2461 = vadd.f32 %v2459, %v2460
  %v2462 = vsel %vm923, %v2439, 0.0
  %v2463 = vadd.f32 %v2461, %v2462
  %v2464 = vsel %vm923, %v2440, 0.0
  %v2465 = vadd.f32 %v2463, %v2464
  %v2466 = vsel %vm923, %v2441, 0.0
  %v2467 = vadd.f32 %v2465, %v2466
  %v2468 = vsel %vm923, %v2442, 0.0
  %v2469 = vadd.f32 %v2467, %v2468
  %v2470 = vsel %vm923, %v2443, 0.0
  %v2471 = vadd.f32 %v2469, %v2470
  %v2472 = vsel %vm923, %v2444, 0.0
  %v2473 = vadd.f32 %v2471, %v2472
  %v2474 = vsel %vm923, %v2445, 0.0
  %v2475 = vadd.f32 %v2473, %v2474
  %v2476 = vsel %vm923, %v2446, 0.0
  %v2477 = vadd.f32 %v2475, %v2476
  %v2478 = vrot.slane %v2477, 4
  %v2479 = vadd.f32 %v2477, %v2478
  %v2480 = vrot.slane %v2479, 2
  %v2481 = vadd.f32 %v2479, %v2480
  %v2482 = vrot.slane %v2481, 1
  %v2483 = vadd.f32 %v2481, %v2482
  %v2484 = vmul.f32 %v2483, %v343
  %v2485 = vadd.f32 %v2484, 1e-05
  %v2486 = vrsqrt.pop %v2485
  %v2487 = vmul.f32 %v2415, %v2486
  %v2488 = vmul.f32 %v2416, %v2486
  %v2489 = vmul.f32 %v2417, %v2486
  %v2490 = vmul.f32 %v2418, %v2486
  %v2491 = vmul.f32 %v2419, %v2486
  %v2492 = vmul.f32 %v2420, %v2486
  %v2493 = vmul.f32 %v2421, %v2486
  %v2494 = vmul.f32 %v2422, %v2486
  %v2495 = vmul.f32 %v2423, %v2486
  %v2496 = vmul.f32 %v2424, %v2486
  %v2497 = vmul.f32 %v2425, %v2486
  %v2498 = vmul.f32 %v2426, %v2486
  %v2499 = vmul.f32 %v2427, %v2486
  %v2500 = vmul.f32 %v2428, %v2486
  %v2501 = vmul.f32 %v2429, %v2486
  %v2502 = vmul.f32 %v2430, %v2486
  %v2503 = vld [vmem:[%s13] sm:$0x1]
  %v2505 = vlaneseq
  %v2506 = vshrl.u32 %v2505, 7
  %v2507 = vsub.s32 0, %v2506
  %v2508 = vrot.slane %v2503, %v2507
  %v2510 = vmul.f32 %v2487, %v2508
  %v2511 = vmul.f32 %v2488, %v2508
  %v2512 = vmul.f32 %v2489, %v2508
  %v2513 = vmul.f32 %v2490, %v2508
  %v2514 = vmul.f32 %v2491, %v2508
  %v2515 = vmul.f32 %v2492, %v2508
  %v2516 = vmul.f32 %v2493, %v2508
  %v2517 = vmul.f32 %v2494, %v2508
  %v2518 = vmul.f32 %v2495, %v2508
  %v2519 = vmul.f32 %v2496, %v2508
  %v2520 = vmul.f32 %v2497, %v2508
  %v2521 = vmul.f32 %v2498, %v2508
  %v2522 = vmul.f32 %v2499, %v2508
  %v2523 = vmul.f32 %v2500, %v2508
  %v2524 = vmul.f32 %v2501, %v2508
  %v2525 = vmul.f32 %v2502, %v2508
  %v2526 = vld [vmem:[%s14] sm:$0x1]
  %v2528 = vlaneseq
  %v2529 = vshrl.u32 %v2528, 7
  %v2530 = vsub.s32 0, %v2529
  %v2531 = vrot.slane %v2526, %v2530
  %v2533 = vadd.f32 %v2510, %v2531
  %v2534 = vadd.f32 %v2511, %v2531
  %v2535 = vadd.f32 %v2512, %v2531
  %v2536 = vadd.f32 %v2513, %v2531
  %v2537 = vadd.f32 %v2514, %v2531
  %v2538 = vadd.f32 %v2515, %v2531
  %v2539 = vadd.f32 %v2516, %v2531
  %v2540 = vadd.f32 %v2517, %v2531
  %v2541 = vadd.f32 %v2518, %v2531
  %v2542 = vadd.f32 %v2519, %v2531
  %v2543 = vadd.f32 %v2520, %v2531
  %v2544 = vadd.f32 %v2521, %v2531
  %v2545 = vadd.f32 %v2522, %v2531
  %v2546 = vadd.f32 %v2523, %v2531
  %v2547 = vadd.f32 %v2524, %v2531
  %v2548 = vadd.f32 %v2525, %v2531
  %v2549 = vmax.f32 %v2533, 0.0
  %v2550 = vmax.f32 %v2534, 0.0
  %v2551 = vmax.f32 %v2535, 0.0
  %v2552 = vmax.f32 %v2536, 0.0
  %v2553 = vmax.f32 %v2537, 0.0
  %v2554 = vmax.f32 %v2538, 0.0
  %v2555 = vmax.f32 %v2539, 0.0
  %v2556 = vmax.f32 %v2540, 0.0
  %v2557 = vmax.f32 %v2541, 0.0
  %v2558 = vmax.f32 %v2542, 0.0
  %v2559 = vmax.f32 %v2543, 0.0
  %v2560 = vmax.f32 %v2544, 0.0
  %v2561 = vmax.f32 %v2545, 0.0
  %v2562 = vmax.f32 %v2546, 0.0
  %v2563 = vmax.f32 %v2547, 0.0
  %v2564 = vmax.f32 %v2548, 0.0
  %2581 = vrot.lane.b32.xlu0 %v1289, 32
  %v2582 = vpop.permute.xlu0 %2581
  %2583 = vrot.lane.b32.xlu0 %v1290, 32
  %v2584 = vpop.permute.xlu0 %2583
  %2585 = vrot.lane.b32.xlu0 %v1291, 32
  %v2586 = vpop.permute.xlu0 %2585
  %2587 = vrot.lane.b32.xlu0 %v1292, 32
  %v2588 = vpop.permute.xlu0 %2587
  %2589 = vrot.lane.b32.xlu0 %v1293, 32
  %v2590 = vpop.permute.xlu0 %2589
  %2591 = vrot.lane.b32.xlu0 %v1294, 32
  %v2592 = vpop.permute.xlu0 %2591
  %2593 = vrot.lane.b32.xlu0 %v1295, 32
  %v2594 = vpop.permute.xlu0 %2593
  %2595 = vrot.lane.b32.xlu0 %v1296, 32
  %v2596 = vpop.permute.xlu0 %2595
  %2597 = vrot.lane.b32.xlu0 %v1297, 32
  %v2598 = vpop.permute.xlu0 %2597
  %2599 = vrot.lane.b32.xlu0 %v1298, 32
  %v2600 = vpop.permute.xlu0 %2599
  %2601 = vrot.lane.b32.xlu0 %v1299, 32
  %v2602 = vpop.permute.xlu0 %2601
  %2603 = vrot.lane.b32.xlu0 %v1300, 32
  %v2604 = vpop.permute.xlu0 %2603
  %2605 = vrot.lane.b32.xlu0 %v1301, 32
  %v2606 = vpop.permute.xlu0 %2605
  %2607 = vrot.lane.b32.xlu0 %v1302, 32
  %v2608 = vpop.permute.xlu0 %2607
  %2609 = vrot.lane.b32.xlu0 %v1303, 32
  %v2610 = vpop.permute.xlu0 %2609
  %2611 = vrot.lane.b32.xlu0 %v1304, 32
  %v2612 = vpop.permute.xlu0 %2611
  %2645 = vrot.lane.b32.xlu0 %v2549, 64
  %v2646 = vpop.permute.xlu0 %2645
  %2647 = vrot.lane.b32.xlu0 %v2550, 64
  %v2648 = vpop.permute.xlu0 %2647
  %2649 = vrot.lane.b32.xlu0 %v2551, 64
  %v2650 = vpop.permute.xlu0 %2649
  %2651 = vrot.lane.b32.xlu0 %v2552, 64
  %v2652 = vpop.permute.xlu0 %2651
  %2653 = vrot.lane.b32.xlu0 %v2553, 64
  %v2654 = vpop.permute.xlu0 %2653
  %2655 = vrot.lane.b32.xlu0 %v2554, 64
  %v2656 = vpop.permute.xlu0 %2655
  %2657 = vrot.lane.b32.xlu0 %v2555, 64
  %v2658 = vpop.permute.xlu0 %2657
  %2659 = vrot.lane.b32.xlu0 %v2556, 64
  %v2660 = vpop.permute.xlu0 %2659
  %2661 = vrot.lane.b32.xlu0 %v2557, 64
  %v2662 = vpop.permute.xlu0 %2661
  %2663 = vrot.lane.b32.xlu0 %v2558, 64
  %v2664 = vpop.permute.xlu0 %2663
  %2665 = vrot.lane.b32.xlu0 %v2559, 64
  %v2666 = vpop.permute.xlu0 %2665
  %2667 = vrot.lane.b32.xlu0 %v2560, 64
  %v2668 = vpop.permute.xlu0 %2667
  %2669 = vrot.lane.b32.xlu0 %v2561, 64
  %v2670 = vpop.permute.xlu0 %2669
  %2671 = vrot.lane.b32.xlu0 %v2562, 64
  %v2672 = vpop.permute.xlu0 %2671
  %2673 = vrot.lane.b32.xlu0 %v2563, 64
  %v2674 = vpop.permute.xlu0 %2673
  %2675 = vrot.lane.b32.xlu0 %v2564, 64
  %v2676 = vpop.permute.xlu0 %2675
  %v2693 = vsel %vm906, %v479, %v2582
  %v2694 = vsel %vm906, %v480, %v2584
  %v2695 = vsel %vm906, %v481, %v2586
  %v2696 = vsel %vm906, %v482, %v2588
  %v2697 = vsel %vm906, %v483, %v2590
  %v2698 = vsel %vm906, %v484, %v2592
  %v2699 = vsel %vm906, %v485, %v2594
  %v2700 = vsel %vm906, %v486, %v2596
  %v2701 = vsel %vm906, %v487, %v2598
  %v2702 = vsel %vm906, %v488, %v2600
  %v2703 = vsel %vm906, %v489, %v2602
  %v2704 = vsel %vm906, %v490, %v2604
  %v2705 = vsel %vm906, %v491, %v2606
  %v2706 = vsel %vm906, %v492, %v2608
  %v2707 = vsel %vm906, %v493, %v2610
  %v2708 = vsel %vm906, %v494, %v2612
  %v2709 = vsel %vm923, %v2693, %v2646
  %v2710 = vsel %vm923, %v2694, %v2648
  %v2711 = vsel %vm923, %v2695, %v2650
  %v2712 = vsel %vm923, %v2696, %v2652
  %v2713 = vsel %vm923, %v2697, %v2654
  %v2714 = vsel %vm923, %v2698, %v2656
  %v2715 = vsel %vm923, %v2699, %v2658
  %v2716 = vsel %vm923, %v2700, %v2660
  %v2717 = vsel %vm923, %v2701, %v2662
  %v2718 = vsel %vm923, %v2702, %v2664
  %v2719 = vsel %vm923, %v2703, %v2666
  %v2720 = vsel %vm923, %v2704, %v2668
  %v2721 = vsel %vm923, %v2705, %v2670
  %v2722 = vsel %vm923, %v2706, %v2672
  %v2723 = vsel %vm923, %v2707, %v2674
  %v2724 = vsel %vm923, %v2708, %v2676
  %v2725 = vpack.c.bf16 %v2710, %v2709
  %v2726 = vpack.c.bf16 %v2712, %v2711
  %v2727 = vpack.c.bf16 %v2714, %v2713
  %v2728 = vpack.c.bf16 %v2716, %v2715
  %v2729 = vpack.c.bf16 %v2718, %v2717
  %v2730 = vpack.c.bf16 %v2720, %v2719
  %v2731 = vpack.c.bf16 %v2722, %v2721
  %v2732 = vpack.c.bf16 %v2724, %v2723
  %v2733 = vld [vmem:[%s15] sm:$0xf]
  %v2734 = vld [vmem:[%s15 + $0x4] sm:$0xf]
  %v2735 = vld [vmem:[%s15 + $0x8] sm:$0xf]
  %v2736 = vld [vmem:[%s15 + $0xc] sm:$0xf]
  %v2737 = vld [vmem:[%s15 + $0x10] sm:$0xf]
  %v2738 = vld [vmem:[%s15 + $0x14] sm:$0xf]
  %v2739 = vld [vmem:[%s15 + $0x18] sm:$0xf]
  %v2740 = vld [vmem:[%s15 + $0x1c] sm:$0xf]
  %v2741 = vld [vmem:[%s15 + $0x20] sm:$0xf]
  %v2742 = vld [vmem:[%s15 + $0x24] sm:$0xf]
  %v2743 = vld [vmem:[%s15 + $0x28] sm:$0xf]
  %v2744 = vld [vmem:[%s15 + $0x2c] sm:$0xf]
  %v2745 = vld [vmem:[%s15 + $0x30] sm:$0xf]
  %v2746 = vld [vmem:[%s15 + $0x34] sm:$0xf]
  %v2747 = vld [vmem:[%s15 + $0x38] sm:$0xf]
  %v2748 = vld [vmem:[%s15 + $0x3c] sm:$0xf]
  %v2749 = vld [vmem:[%s16] sm:$0x1]
  %v2751 = vlaneseq
  %v2752 = vshrl.u32 %v2751, 7
  %v2753 = vsub.s32 0, %v2752
  %v2754 = vrot.slane %v2749, %v2753
  %v2772 = vunpack.c.l.b16 %v2733
  %v2773 = vunpack.c.l.b16 %v2734
  %v2774 = vunpack.c.l.b16 %v2735
  %v2775 = vunpack.c.l.b16 %v2736
  %v2776 = vunpack.c.l.b16 %v2737
  %v2777 = vunpack.c.l.b16 %v2738
  %v2778 = vunpack.c.l.b16 %v2739
  %v2779 = vunpack.c.l.b16 %v2740
  %v2780 = vunpack.c.l.b16 %v2741
  %v2781 = vunpack.c.l.b16 %v2742
  %v2782 = vunpack.c.l.b16 %v2743
  %v2783 = vunpack.c.l.b16 %v2744
  %v2784 = vunpack.c.l.b16 %v2745
  %v2785 = vunpack.c.l.b16 %v2746
  %v2786 = vunpack.c.l.b16 %v2747
  %v2787 = vunpack.c.l.b16 %v2748
  %v2788 = vpack.c.b16 %v2773, %v2772
  %v2789 = vpack.c.b16 %v2775, %v2774
  %v2790 = vpack.c.b16 %v2777, %v2776
  %v2791 = vpack.c.b16 %v2779, %v2778
  %v2792 = vpack.c.b16 %v2781, %v2780
  %v2793 = vpack.c.b16 %v2783, %v2782
  %v2794 = vpack.c.b16 %v2785, %v2784
  %v2795 = vpack.c.b16 %v2787, %v2786
  %2804 = vmatprep.subr.bf16.mxu0 0
  %2805 = vmatpush1.bf16.msra.mxu0 %v2788
  %2806 = vmatprep.subr.bf16.mxu0 0
  %2807 = vmatpush1.bf16.msra.mxu0 %v2789
  %2808 = vmatprep.subr.bf16.mxu0 0
  %2809 = vmatpush1.bf16.msra.mxu0 %v2790
  %2810 = vmatprep.subr.bf16.mxu0 0
  %2811 = vmatpush1.bf16.msra.mxu0 %v2791
  %2812 = vmatprep.subr.bf16.mxu0 0
  %2813 = vmatpush1.bf16.msra.mxu0 %v2792
  %2814 = vmatprep.subr.bf16.mxu0 0
  %2815 = vmatpush1.bf16.msra.mxu0 %v2793
  %2816 = vmatprep.subr.bf16.mxu0 0
  %2817 = vmatpush1.bf16.msra.mxu0 %v2794
  %2818 = vmatprep.subr.bf16.mxu0 0
  %2819 = vmatpush1.bf16.msra.mxu0 %v2795
  %2820 = vmatprep.subr.bf16.mxu0 0
  %2821 = vmatpush1.bf16.msra.mxu0 0
  %2822 = vmatprep.subr.bf16.mxu0 0
  %2823 = vmatpush1.bf16.msra.mxu0 0
  %2824 = vmatprep.subr.bf16.mxu0 0
  %2825 = vmatpush1.bf16.msra.mxu0 0
  %2826 = vmatprep.subr.bf16.mxu0 0
  %2827 = vmatpush1.bf16.msra.mxu0 0
  %2828 = vmatprep.subr.bf16.mxu0 0
  %2829 = vmatpush1.bf16.msra.mxu0 0
  %2830 = vmatprep.subr.bf16.mxu0 0
  %2831 = vmatpush1.bf16.msra.mxu0 0
  %2832 = vmatprep.subr.bf16.mxu0 0
  %2833 = vmatpush1.bf16.msra.mxu0 0
  %2834 = vmatprep.subr.bf16.mxu0 0
  %2835 = vmatpush1.bf16.msra.mxu0 0
  %2836 = vmatprep.mubr.bf16.mxu0 0
  %2837 = vmatmul.mubr.bf16.gmra.mrb[0].mxu0 %v2725
  %v2838 = vpop.f32.mrb[0].mxu0
  %v2839 = vadd.f32 %v2754, %v2838
  %v2840 = vpop.f32.mrb[0].mxu0
  %v2841 = vpop.f32.mrb[0].mxu0
  %v2842 = vadd.f32 %v2754, %v2841
  %v2843 = vpop.f32.mrb[0].mxu0
  %2844 = vmatprep.mubr.bf16.mxu0 0
  %2845 = vmatmul.mubr.bf16.gmra.mrb[0].mxu0 %v2726
  %v2846 = vpop.f32.mrb[0].mxu0
  %v2847 = vadd.f32 %v2754, %v2846
  %v2848 = vpop.f32.mrb[0].mxu0
  %v2849 = vpop.f32.mrb[0].mxu0
  %v2850 = vadd.f32 %v2754, %v2849
  %v2851 = vpop.f32.mrb[0].mxu0
  %2852 = vmatprep.mubr.bf16.mxu0 0
  %2853 = vmatmul.mubr.bf16.gmra.mrb[0].mxu0 %v2727
  %v2854 = vpop.f32.mrb[0].mxu0
  %v2855 = vadd.f32 %v2754, %v2854
  %v2856 = vpop.f32.mrb[0].mxu0
  %v2857 = vpop.f32.mrb[0].mxu0
  %v2858 = vadd.f32 %v2754, %v2857
  %v2859 = vpop.f32.mrb[0].mxu0
  %2860 = vmatprep.mubr.bf16.mxu0 0
  %2861 = vmatmul.mubr.bf16.gmra.mrb[0].mxu0 %v2728
  %v2862 = vpop.f32.mrb[0].mxu0
  %v2863 = vadd.f32 %v2754, %v2862
  %v2864 = vpop.f32.mrb[0].mxu0
  %v2865 = vpop.f32.mrb[0].mxu0
  %v2866 = vadd.f32 %v2754, %v2865
  %v2867 = vpop.f32.mrb[0].mxu0
  %2868 = vmatprep.mubr.bf16.mxu0 0
  %2869 = vmatmul.mubr.bf16.gmra.mrb[0].mxu0 %v2729
  %v2870 = vpop.f32.mrb[0].mxu0
  %v2871 = vadd.f32 %v2754, %v2870
  %v2872 = vpop.f32.mrb[0].mxu0
  %v2873 = vpop.f32.mrb[0].mxu0
  %v2874 = vadd.f32 %v2754, %v2873
  %v2875 = vpop.f32.mrb[0].mxu0
  %2876 = vmatprep.mubr.bf16.mxu0 0
  %2877 = vmatmul.mubr.bf16.gmra.mrb[0].mxu0 %v2730
  %v2878 = vpop.f32.mrb[0].mxu0
  %v2879 = vadd.f32 %v2754, %v2878
  %v2880 = vpop.f32.mrb[0].mxu0
  %v2881 = vpop.f32.mrb[0].mxu0
  %v2882 = vadd.f32 %v2754, %v2881
  %v2883 = vpop.f32.mrb[0].mxu0
  %2884 = vmatprep.mubr.bf16.mxu0 0
  %2885 = vmatmul.mubr.bf16.gmra.mrb[0].mxu0 %v2731
  %v2886 = vpop.f32.mrb[0].mxu0
  %v2887 = vadd.f32 %v2754, %v2886
  %v2888 = vpop.f32.mrb[0].mxu0
  %v2889 = vpop.f32.mrb[0].mxu0
  %v2890 = vadd.f32 %v2754, %v2889
  %v2891 = vpop.f32.mrb[0].mxu0
  %2892 = vmatprep.mubr.bf16.mxu0 0
  %2893 = vmatmul.mubr.bf16.gmra.mrb[0].mxu0 %v2732
  %v2894 = vpop.f32.mrb[0].mxu0
  %v2895 = vadd.f32 %v2754, %v2894
  %v2896 = vpop.f32.mrb[0].mxu0
  %v2897 = vpop.f32.mrb[0].mxu0
  %v2898 = vadd.f32 %v2754, %v2897
  %v2899 = vpop.f32.mrb[0].mxu0
  %2900 = vdwg.mxu0
  %v2901 = vadd.f32 %v502, %v2839
  %v2902 = vadd.f32 %v503, %v2842
  %v2903 = vadd.f32 %v504, %v2847
  %v2904 = vadd.f32 %v505, %v2850
  %v2905 = vadd.f32 %v506, %v2855
  %v2906 = vadd.f32 %v507, %v2858
  %v2907 = vadd.f32 %v508, %v2863
  %v2908 = vadd.f32 %v509, %v2866
  %v2909 = vadd.f32 %v510, %v2871
  %v2910 = vadd.f32 %v511, %v2874
  %v2911 = vadd.f32 %v512, %v2879
  %v2912 = vadd.f32 %v513, %v2882
  %v2913 = vadd.f32 %v514, %v2887
  %v2914 = vadd.f32 %v515, %v2890
  %v2915 = vadd.f32 %v516, %v2895
  %v2916 = vadd.f32 %v517, %v2898
  %v2917 = vadd.f32 %v2901, %v2902
  %v2918 = vadd.f32 %v2917, %v2903
  %v2919 = vadd.f32 %v2918, %v2904
  %v2920 = vadd.f32 %v2919, %v2905
  %v2921 = vadd.f32 %v2920, %v2906
  %v2922 = vadd.f32 %v2921, %v2907
  %v2923 = vadd.f32 %v2922, %v2908
  %v2924 = vadd.f32 %v2923, %v2909
  %v2925 = vadd.f32 %v2924, %v2910
  %v2926 = vadd.f32 %v2925, %v2911
  %v2927 = vadd.f32 %v2926, %v2912
  %v2928 = vadd.f32 %v2927, %v2913
  %v2929 = vadd.f32 %v2928, %v2914
  %v2930 = vadd.f32 %v2929, %v2915
  %v2931 = vadd.f32 %v2930, %v2916
  %v2932 = vrot.slane %v2931, 4
  %v2933 = vadd.f32 %v2931, %v2932
  %v2934 = vrot.slane %v2933, 2
  %v2935 = vadd.f32 %v2933, %v2934
  %v2936 = vrot.slane %v2935, 1
  %v2937 = vadd.f32 %v2935, %v2936
  %v2938 = vmul.f32 %v2937, %v343
  %v2939 = vsub.f32 %v2901, %v2938
  %v2940 = vsub.f32 %v2902, %v2938
  %v2941 = vsub.f32 %v2903, %v2938
  %v2942 = vsub.f32 %v2904, %v2938
  %v2943 = vsub.f32 %v2905, %v2938
  %v2944 = vsub.f32 %v2906, %v2938
  %v2945 = vsub.f32 %v2907, %v2938
  %v2946 = vsub.f32 %v2908, %v2938
  %v2947 = vsub.f32 %v2909, %v2938
  %v2948 = vsub.f32 %v2910, %v2938
  %v2949 = vsub.f32 %v2911, %v2938
  %v2950 = vsub.f32 %v2912, %v2938
  %v2951 = vsub.f32 %v2913, %v2938
  %v2952 = vsub.f32 %v2914, %v2938
  %v2953 = vsub.f32 %v2915, %v2938
  %v2954 = vsub.f32 %v2916, %v2938
  %v2955 = vmul.f32 %v2939, %v2939
  %v2956 = vmul.f32 %v2940, %v2940
  %v2957 = vmul.f32 %v2941, %v2941
  %v2958 = vmul.f32 %v2942, %v2942
  %v2959 = vmul.f32 %v2943, %v2943
  %v2960 = vmul.f32 %v2944, %v2944
  %v2961 = vmul.f32 %v2945, %v2945
  %v2962 = vmul.f32 %v2946, %v2946
  %v2963 = vmul.f32 %v2947, %v2947
  %v2964 = vmul.f32 %v2948, %v2948
  %v2965 = vmul.f32 %v2949, %v2949
  %v2966 = vmul.f32 %v2950, %v2950
  %v2967 = vmul.f32 %v2951, %v2951
  %v2968 = vmul.f32 %v2952, %v2952
  %v2969 = vmul.f32 %v2953, %v2953
  %v2970 = vmul.f32 %v2954, %v2954
  %v2971 = vadd.f32 %v2955, %v2956
  %v2972 = vadd.f32 %v2971, %v2957
  %v2973 = vadd.f32 %v2972, %v2958
  %v2974 = vadd.f32 %v2973, %v2959
  %v2975 = vadd.f32 %v2974, %v2960
  %v2976 = vadd.f32 %v2975, %v2961
  %v2977 = vadd.f32 %v2976, %v2962
  %v2978 = vadd.f32 %v2977, %v2963
  %v2979 = vadd.f32 %v2978, %v2964
  %v2980 = vadd.f32 %v2979, %v2965
  %v2981 = vadd.f32 %v2980, %v2966
  %v2982 = vadd.f32 %v2981, %v2967
  %v2983 = vadd.f32 %v2982, %v2968
  %v2984 = vadd.f32 %v2983, %v2969
  %v2985 = vadd.f32 %v2984, %v2970
  %v2986 = vrot.slane %v2985, 4
  %v2987 = vadd.f32 %v2985, %v2986
  %v2988 = vrot.slane %v2987, 2
  %v2989 = vadd.f32 %v2987, %v2988
  %v2990 = vrot.slane %v2989, 1
  %v2991 = vadd.f32 %v2989, %v2990
  %v2992 = vmul.f32 %v2991, %v343
  %v2993 = vadd.f32 %v2992, 1e-05
  %v2994 = vrsqrt.pop %v2993
  %v2995 = vmul.f32 %v2939, %v2994
  %v2996 = vmul.f32 %v2940, %v2994
  %v2997 = vmul.f32 %v2941, %v2994
  %v2998 = vmul.f32 %v2942, %v2994
  %v2999 = vmul.f32 %v2943, %v2994
  %v3000 = vmul.f32 %v2944, %v2994
  %v3001 = vmul.f32 %v2945, %v2994
  %v3002 = vmul.f32 %v2946, %v2994
  %v3003 = vmul.f32 %v2947, %v2994
  %v3004 = vmul.f32 %v2948, %v2994
  %v3005 = vmul.f32 %v2949, %v2994
  %v3006 = vmul.f32 %v2950, %v2994
  %v3007 = vmul.f32 %v2951, %v2994
  %v3008 = vmul.f32 %v2952, %v2994
  %v3009 = vmul.f32 %v2953, %v2994
  %v3010 = vmul.f32 %v2954, %v2994
  %v3011 = vld [vmem:[%s18] sm:$0x1]
  %v3013 = vlaneseq
  %v3014 = vshrl.u32 %v3013, 7
  %v3015 = vsub.s32 0, %v3014
  %v3016 = vrot.slane %v3011, %v3015
  %v3018 = vmul.f32 %v2995, %v3016
  %v3019 = vmul.f32 %v2996, %v3016
  %v3020 = vmul.f32 %v2997, %v3016
  %v3021 = vmul.f32 %v2998, %v3016
  %v3022 = vmul.f32 %v2999, %v3016
  %v3023 = vmul.f32 %v3000, %v3016
  %v3024 = vmul.f32 %v3001, %v3016
  %v3025 = vmul.f32 %v3002, %v3016
  %v3026 = vmul.f32 %v3003, %v3016
  %v3027 = vmul.f32 %v3004, %v3016
  %v3028 = vmul.f32 %v3005, %v3016
  %v3029 = vmul.f32 %v3006, %v3016
  %v3030 = vmul.f32 %v3007, %v3016
  %v3031 = vmul.f32 %v3008, %v3016
  %v3032 = vmul.f32 %v3009, %v3016
  %v3033 = vmul.f32 %v3010, %v3016
  %v3034 = vld [vmem:[%s19] sm:$0x1]
  %v3036 = vlaneseq
  %v3037 = vshrl.u32 %v3036, 7
  %v3038 = vsub.s32 0, %v3037
  %v3039 = vrot.slane %v3034, %v3038
  %v3041 = vadd.f32 %v3018, %v3039
  %v3042 = vadd.f32 %v3019, %v3039
  %v3043 = vadd.f32 %v3020, %v3039
  %v3044 = vadd.f32 %v3021, %v3039
  %v3045 = vadd.f32 %v3022, %v3039
  %v3046 = vadd.f32 %v3023, %v3039
  %v3047 = vadd.f32 %v3024, %v3039
  %v3048 = vadd.f32 %v3025, %v3039
  %v3049 = vadd.f32 %v3026, %v3039
  %v3050 = vadd.f32 %v3027, %v3039
  %v3051 = vadd.f32 %v3028, %v3039
  %v3052 = vadd.f32 %v3029, %v3039
  %v3053 = vadd.f32 %v3030, %v3039
  %v3054 = vadd.f32 %v3031, %v3039
  %v3055 = vadd.f32 %v3032, %v3039
  %v3056 = vadd.f32 %v3033, %v3039
  %v3057 = vmax.f32 %v3041, 0.0
  %v3058 = vmax.f32 %v3042, 0.0
  %v3059 = vmax.f32 %v3043, 0.0
  %v3060 = vmax.f32 %v3044, 0.0
  %v3061 = vmax.f32 %v3045, 0.0
  %v3062 = vmax.f32 %v3046, 0.0
  %v3063 = vmax.f32 %v3047, 0.0
  %v3064 = vmax.f32 %v3048, 0.0
  %v3065 = vmax.f32 %v3049, 0.0
  %v3066 = vmax.f32 %v3050, 0.0
  %v3067 = vmax.f32 %v3051, 0.0
  %v3068 = vmax.f32 %v3052, 0.0
  %v3069 = vmax.f32 %v3053, 0.0
  %v3070 = vmax.f32 %v3054, 0.0
  %v3071 = vmax.f32 %v3055, 0.0
  %v3072 = vmax.f32 %v3056, 0.0
  %3073 = vst [vmem:[%s20] sm:$0xff] %v3057
  %3074 = vst [vmem:[%s20 + $0x8] sm:$0xff] %v3058
  %3075 = vst [vmem:[%s20 + $0x10] sm:$0xff] %v3059
  %3076 = vst [vmem:[%s20 + $0x18] sm:$0xff] %v3060
  %3077 = vst [vmem:[%s20 + $0x20] sm:$0xff] %v3061
  %3078 = vst [vmem:[%s20 + $0x28] sm:$0xff] %v3062
  %3079 = vst [vmem:[%s20 + $0x30] sm:$0xff] %v3063
  %3080 = vst [vmem:[%s20 + $0x38] sm:$0xff] %v3064
  %3081 = vst [vmem:[%s20 + $0x40] sm:$0xff] %v3065
  %3082 = vst [vmem:[%s20 + $0x48] sm:$0xff] %v3066
  %3083 = vst [vmem:[%s20 + $0x50] sm:$0xff] %v3067
  %3084 = vst [vmem:[%s20 + $0x58] sm:$0xff] %v3068
  %3085 = vst [vmem:[%s20 + $0x60] sm:$0xff] %v3069
  %3086 = vst [vmem:[%s20 + $0x68] sm:$0xff] %v3070
  %3087 = vst [vmem:[%s20 + $0x70] sm:$0xff] %v3071
  %3088 = vst [vmem:[%s20 + $0x78] sm:$0xff] %v3072
  // Predicated region
  $region82: #{inception_resnet_a.1} parent=0 // pred_check
    _
  $region83: #{inception_resnet_a.1} parent=0 // pred_check_branch
    %3090 = sbr.rel (0) target = $region85
  $region84: #{inception_resnet_a.1} parent=0 // pred_region
    _
  $region85: #{inception_resnet_a.1} parent=0 // pred_fallthru
    _
  // Predicated region
  $region86: #{inception_resnet_a.1} parent=0 // pred_check
    _
  $region87: #{inception_resnet_a.1} parent=0 // pred_check_branch
    %3092 = sbr.rel (0) target = $region89
  $region88: #{inception_resnet_a.1} parent=0 // pred_region
    _
  $region89: #{inception_resnet_a.1} parent=0 // pred_fallthru
    _

</llo_original>
